<compile_context>
chip_gen: v5e
topology: v5e:2x2
jax: 0.10.0
libtpu: 0.0.40
codegen_flags: <defaults>
</compile_context>

<pallas_src>
import functools
import math

import jax
import jax.numpy as jnp
from jax import lax
from jax.experimental import pallas as pl
from jax.experimental.pallas import tpu as pltpu


def _round_up(x, m):
    return ((x + m - 1) // m) * m


def _vmem_cap_bytes():
    """75% of the physical per-core VMEM (conservative fallback = v7x size)."""
    try:
        physical = int(pltpu.get_tpu_info().vmem_capacity_bytes)
    except Exception:
        physical = 64 * 1024 * 1024
    return (physical * 3) // 4


def simplified_attention_kernel(
    x_q_ref, x_kv_ref,
    wq_ref, wk_ref, wv_ref, wd_ref,
    bq_ref, bk_ref, bv_ref, bd_ref,
    out_ref,
    kt_scratch, v_scratch,
    *, scale, kv_valid, kv_padded, compute_dtype,
):
    qi = pl.program_id(1)

    # ---- K / V projections: once per batch element, resident in VMEM.
    # NOTE: relies on the query-tile axis being the inner, sequentially
    # executed ("arbitrary") axis with batch outer; do not reorder the grid
    # or mark the qi axis parallel (stale K/V would be read).
    @pl.when(qi == 0)
    def _():
        x_kv = x_kv_ref[...]                                       # (S_kv, D) compute_dtype
        k = jnp.dot(x_kv, wk_ref[...],
                    preferred_element_type=jnp.float32) + bk_ref[...]
        v = jnp.dot(x_kv, wv_ref[...],
                    preferred_element_type=jnp.float32) + bv_ref[...]
        # Store K transposed so every query tile's Q @ K^T is a plain NN
        # matmul on the MXU (transpose amortized to once per batch element).
        kt_scratch[...] = jnp.transpose(k).astype(kt_scratch.dtype)
        v_scratch[...] = v.astype(v_scratch.dtype)

    # ---- Q projection for this query tile -----------------------------------
    q = (jnp.dot(x_q_ref[...], wq_ref[...],
                 preferred_element_type=jnp.float32) + bq_ref[...])  # (tq, D) f32

    # ---- scores = Q @ K^T / sqrt(D) ------------------------------------------
    s = jnp.dot(q.astype(compute_dtype), kt_scratch[...],
                preferred_element_type=jnp.float32) * scale          # (tq, S_kv)

    if kv_valid < kv_padded:            # static: mask zero-padded key columns
        col = lax.broadcasted_iota(jnp.int32, s.shape, 1)
        s = jnp.where(col < kv_valid, s, jnp.float32(-1e30))

    # ---- numerically-stable softmax, all in f32 ------------------------------
    m = jnp.max(s, axis=-1, keepdims=True)
    p = jnp.exp(s - m)
    l = jnp.sum(p, axis=-1, keepdims=True)
    probs = p * pl.reciprocal(l, approx=True)    # EUP reciprocal + VPU multiply

    ctx = jnp.dot(probs.astype(compute_dtype), v_scratch[...],
                  preferred_element_type=jnp.float32)                # (tq, D)

    # ---- output dense projection ---------------------------------------------
    out = (jnp.dot(ctx.astype(compute_dtype), wd_ref[...],
                   preferred_element_type=jnp.float32) + bd_ref[...])
    out_ref[...] = out.astype(out_ref.dtype)


def simplified_attention(hidden_states, params, *, other_hidden_states=None,
                         self_attention=True, tq=256,
                         mxu_dtype=jnp.bfloat16):
    """hidden_states: (B, S_kv, D).  Queries come from hidden_states when
    self_attention=True, otherwise from other_hidden_states (B, S_q, D).
    Weights in `params` are stored as (in, out) == torch_weight.T so the
    kernel computes x @ W directly."""
    wq, bq, wk, bk, wv, bv, wd, bd = params
    out_dtype = hidden_states.dtype
    B, S_kv, D = hidden_states.shape
    q_src = hidden_states if self_attention else other_hidden_states
    assert q_src is not None and q_src.shape[0] == B and q_src.shape[-1] == D
    S_q = q_src.shape[1]

    # ---- tiling / padding -----------------------------------------------------
    # tq: sweep {128, 256}. 128 matches v5e's 4x128^2 MXU tiles and halves the
    # f32 (tq, S_kv) softmax temporaries; 256 gives bigger MXU row blocks.
    tq_eff = _round_up(min(tq, _round_up(S_q, 8)), 8)
    S_q_pad = _round_up(S_q, tq_eff)
    S_kv_pad = _round_up(S_kv, 128)              # lane-dense scores / softmax

    x_q = q_src.astype(mxu_dtype)                # bf16 activations by default
    if S_q_pad != S_q:
        x_q = jnp.pad(x_q, ((0, 0), (0, S_q_pad - S_q), (0, 0)))
    x_kv = hidden_states.astype(mxu_dtype)
    if S_kv_pad != S_kv:
        x_kv = jnp.pad(x_kv, ((0, 0), (0, S_kv_pad - S_kv), (0, 0)))

    grid = (B, S_q_pad // tq_eff)

    wbytes = jnp.dtype(mxu_dtype).itemsize
    f32b = 4

    def _need(const_bufs):
        # Accurate accounting (no 2x hedge); +4 MiB fixed headroom added below.
        return (
            2 * tq_eff * D * wbytes              # x_q tile (double-buffered)
            + 2 * S_kv_pad * D * wbytes          # x_kv block (double-buffered)
            + 2 * tq_eff * D * f32b              # out tile (double-buffered)
            + const_bufs * 4 * D * D * wbytes    # 4 weight matrices
            + const_bufs * 4 * 8 * D * f32b      # 4 biases ((1,D) -> 8 sublanes)
            + 2 * S_kv_pad * D * wbytes          # K^T / V VMEM scratch
            + 2 * S_kv_pad * D * f32b            # f32 K/V accumulation (qi==0)
            + 2 * tq_eff * D * f32b              # q / ctx temporaries
            + 3 * tq_eff * S_kv_pad * f32b       # s / p / probs temporaries
            + tq_eff * S_kv_pad * wbytes         # probs cast for P @ V
        )

    # ---- cost estimate so XLA can schedule around the kernel -----------------
    flops = B * (4 * D * D * (S_q_pad + S_kv_pad) + 4 * S_q_pad * S_kv_pad * D)
    cost = pl.CostEstimate(
        flops=int(flops),
        transcendentals=int(B * S_q_pad * S_kv_pad),
        bytes_accessed=int(wbytes * (x_q.size + x_kv.size + 4 * D * D)
                           + f32b * (B * S_q_pad * D + 4 * D)),
    )

    kernel = functools.partial(
        simplified_attention_kernel,
        scale=1.0 / math.sqrt(D),
        kv_valid=S_kv, kv_padded=S_kv_pad,
        compute_dtype=mxu_dtype)

    w_cast = lambda w: w.astype(mxu_dtype)
    b_2d = lambda v: v.reshape(1, D).astype(jnp.float32)
    operands = (x_q, x_kv,
                w_cast(wq), w_cast(wk), w_cast(wv), w_cast(wd),
                b_2d(bq), b_2d(bk), b_2d(bv), b_2d(bd))

    def _run(single_buffer_consts):
        # Constant-index weight/bias blocks are DMA'd once -> single buffer.
        const_kw = ({"pipeline_mode": pl.Buffered(1)}
                    if single_buffer_consts else {})
        w_spec = pl.BlockSpec((D, D), lambda b, i: (0, 0), **const_kw)
        b_spec = pl.BlockSpec((1, D), lambda b, i: (0, 0), **const_kw)
        vmem_limit = int(min(
            _vmem_cap_bytes(),
            max(_need(1 if single_buffer_consts else 2) + (4 << 20), 32 << 20)))

        grid_spec = pltpu.PrefetchScalarGridSpec(
            num_scalar_prefetch=0,
            grid=grid,
            in_specs=[
                pl.BlockSpec((None, tq_eff, D), lambda b, i: (b, i, 0)),    # x_q
                pl.BlockSpec((None, S_kv_pad, D), lambda b, i: (b, 0, 0)),  # x_kv
                w_spec, w_spec, w_spec, w_spec,                             # Wq..Wd
                b_spec, b_spec, b_spec, b_spec,                             # bq..bd
            ],
            out_specs=pl.BlockSpec((None, tq_eff, D), lambda b, i: (b, i, 0)),
            scratch_shapes=[pltpu.VMEM((D, S_kv_pad), mxu_dtype),   # K^T
                            pltpu.VMEM((S_kv_pad, D), mxu_dtype)])  # V

        return pl.pallas_call(
            kernel,
            out_shape=jax.ShapeDtypeStruct((B, S_q_pad, D), out_dtype),
            grid_spec=grid_spec,
            compiler_params=pltpu.CompilerParams(
                dimension_semantics=("parallel", "arbitrary"),
                vmem_limit_bytes=vmem_limit),
            cost_estimate=cost,
        )(*operands)

    try:
        out = _run(True)
    except Exception:
        # pipeline_mode=pl.Buffered(1) not accepted on this JAX version:
        # retry with default double-buffering (correctness identical).
        out = _run(False)

    return out[:, :S_q, :]


def init_params(key, model_dim):
    """Mirror nn.Linear init; weights stored as (in, out) == torch W.T."""
    ks = jax.random.split(key, 8)

    def linear(kw, kb, fan_in, fan_out):
        bound = 1.0 / math.sqrt(fan_in)
        w = jax.random.uniform(kw, (fan_in, fan_out), jnp.float32, -bound, bound)
        b = jax.random.uniform(kb, (fan_out,), jnp.float32, -bound, bound)
        return w, b

    wq, bq = linear(ks[0], ks[1], model_dim, model_dim)
    wk, bk = linear(ks[2], ks[3], model_dim, model_dim)
    wv, bv = linear(ks[4], ks[5], model_dim, model_dim)
    wd, bd = linear(ks[6], ks[7], model_dim, model_dim)
    return (wq, bq, wk, bk, wv, bv, wd, bd)


def reference_forward(hidden, params, other=None, self_attention=True):
    """Pure-JAX reference matching the PyTorch forward."""
    wq, bq, wk, bk, wv, bv, wd, bd = params
    hp = lax.Precision.HIGHEST
    q_src = hidden if self_attention else other
    q = jnp.einsum('bsd,de->bse', q_src, wq, precision=hp) + bq
    k = jnp.einsum('bsd,de->bse', hidden, wk, precision=hp) + bk
    v = jnp.einsum('bsd,de->bse', hidden, wv, precision=hp) + bv
    s = jnp.einsum('bqd,bkd->bqk', q, k, precision=hp) / math.sqrt(hidden.shape[-1])
    p = jax.nn.softmax(s, axis=-1)
    ctx = jnp.einsum('bqk,bkd->bqd', p, v, precision=hp)
    return jnp.einsum('bsd,de->bse', ctx, wd, precision=hp) + bd


if __name__ == "__main__":
    model_dim = 128          # lane-dense (multiple of 128); module default is 512
    batch, seq = 2, 10       # seq=10 exercises the padding + key-mask path

    key = jax.random.PRNGKey(0)
    k_x, k_p = jax.random.split(key)
    params = init_params(k_p, model_dim)
    hidden_states = jax.random.normal(k_x, (batch, seq, model_dim), jnp.float32)

    ref = reference_forward(hidden_states, params)

    # Default path: bf16 MXU operands on all generations, f32 softmax / accum.
    out = simplified_attention(hidden_states, params)
    out = jax.block_until_ready(out)
    assert out.shape == (batch, seq, model_dim)
    assert jnp.allclose(out, ref, atol=1e-1, rtol=1e-1), "bf16 path mismatch"

    # f32 MXU operands (structure check; tolerance covers the approx
    # reciprocal and the MXU multi-pass f32 decomposition).
    out_f32 = simplified_attention(hidden_states, params, mxu_dtype=jnp.float32)
    out_f32 = jax.block_until_ready(out_f32)
    assert jnp.allclose(out_f32, ref, atol=2e-2, rtol=2e-2), "f32 path mismatch"

    print("KERNEL_OK")
</pallas_src>

<mosaic_0001>
module attributes {stable_mosaic.version = 11 : i64} {
  func.func @simplified_attention_kernel(%arg0: i32, %arg1: i32, %arg2: memref<1x16x128xbf16, #tpu.memory_space<vmem>>, %arg3: memref<1x128x128xbf16, #tpu.memory_space<vmem>>, %arg4: memref<128x128xbf16, #tpu.memory_space<vmem>>, %arg5: memref<128x128xbf16, #tpu.memory_space<vmem>>, %arg6: memref<128x128xbf16, #tpu.memory_space<vmem>>, %arg7: memref<128x128xbf16, #tpu.memory_space<vmem>>, %arg8: memref<1x128xf32, #tpu.memory_space<vmem>>, %arg9: memref<1x128xf32, #tpu.memory_space<vmem>>, %arg10: memref<1x128xf32, #tpu.memory_space<vmem>>, %arg11: memref<1x128xf32, #tpu.memory_space<vmem>>, %arg12: memref<1x16x128xf32, #tpu.memory_space<vmem>>, %arg13: memref<128x128xbf16, #tpu.memory_space<vmem>>, %arg14: memref<128x128xbf16, #tpu.memory_space<vmem>>) attributes {dimension_semantics = [#tpu.dimension_semantics<parallel>, #tpu.dimension_semantics<arbitrary>], iteration_bounds = array<i64: 2, 1>, scalar_prefetch = 0 : i64, scratch_operands = 2 : i64, tpu.core_type = #tpu.core_type<tc>, window_params = [{transform_indices = @transform_0, window_bounds = array<i64: 1, 16, 128>}, {transform_indices = @transform_1, window_bounds = array<i64: 1, 128, 128>}, {pipeline_mode = #tpu.pipeline_mode<synchronous>, transform_indices = @transform_2, window_bounds = array<i64: 128, 128>}, {pipeline_mode = #tpu.pipeline_mode<synchronous>, transform_indices = @transform_3, window_bounds = array<i64: 128, 128>}, {pipeline_mode = #tpu.pipeline_mode<synchronous>, transform_indices = @transform_4, window_bounds = array<i64: 128, 128>}, {pipeline_mode = #tpu.pipeline_mode<synchronous>, transform_indices = @transform_5, window_bounds = array<i64: 128, 128>}, {pipeline_mode = #tpu.pipeline_mode<synchronous>, transform_indices = @transform_6, window_bounds = array<i64: 1, 128>}, {pipeline_mode = #tpu.pipeline_mode<synchronous>, transform_indices = @transform_7, window_bounds = array<i64: 1, 128>}, {pipeline_mode = #tpu.pipeline_mode<synchronous>, transform_indices = @transform_8, window_bounds = array<i64: 1, 128>}, {pipeline_mode = #tpu.pipeline_mode<synchronous>, transform_indices = @transform_9, window_bounds = array<i64: 1, 128>}, {transform_indices = @transform_10, window_bounds = array<i64: 1, 16, 128>}]} {
    %c0_i32 = arith.constant 0 : i32
    %0 = arith.cmpi eq, %arg1, %c0_i32 : i32
    %1 = arith.extui %0 : i1 to i32
    %c0_i32_0 = arith.constant 0 : i32
    %2 = arith.cmpi ne, %1, %c0_i32_0 : i32
    scf.if %2 {
      %c0_25 = arith.constant 0 : index
      %c0_26 = arith.constant 0 : index
      %c0_27 = arith.constant 0 : index
      %42 = vector.load %arg3[%c0_25, %c0_26, %c0_27] : memref<1x128x128xbf16, #tpu.memory_space<vmem>>, vector<1x128x128xbf16>
      %43 = vector.shape_cast %42 : vector<1x128x128xbf16> to vector<128x128xbf16>
      %c0_28 = arith.constant 0 : index
      %c0_29 = arith.constant 0 : index
      %44 = vector.load %arg5[%c0_28, %c0_29] : memref<128x128xbf16, #tpu.memory_space<vmem>>, vector<128x128xbf16>
      %cst_30 = arith.constant dense<0.000000e+00> : vector<128x128xf32>
      %45 = tpu.matmul %43, %44, %cst_30 {dimension_numbers = #tpu.dot_dimension_numbers<[1], [0], [0], [1], [0, 0, 1, 1], [], []>} : vector<128x128xbf16>, vector<128x128xbf16>, vector<128x128xf32> -> vector<128x128xf32>
      %c0_31 = arith.constant 0 : index
      %c0_32 = arith.constant 0 : index
      %46 = vector.load %arg9[%c0_31, %c0_32] : memref<1x128xf32, #tpu.memory_space<vmem>>, vector<1x128xf32>
      %47 = vector.broadcast %46 : vector<1x128xf32> to vector<128x128xf32>
      %48 = arith.addf %45, %47 : vector<128x128xf32>
      %c0_33 = arith.constant 0 : index
      %c0_34 = arith.constant 0 : index
      %49 = vector.load %arg6[%c0_33, %c0_34] : memref<128x128xbf16, #tpu.memory_space<vmem>>, vector<128x128xbf16>
      %cst_35 = arith.constant dense<0.000000e+00> : vector<128x128xf32>
      %50 = tpu.matmul %43, %49, %cst_35 {dimension_numbers = #tpu.dot_dimension_numbers<[1], [0], [0], [1], [0, 0, 1, 1], [], []>} : vector<128x128xbf16>, vector<128x128xbf16>, vector<128x128xf32> -> vector<128x128xf32>
      %c0_36 = arith.constant 0 : index
      %c0_37 = arith.constant 0 : index
      %51 = vector.load %arg10[%c0_36, %c0_37] : memref<1x128xf32, #tpu.memory_space<vmem>>, vector<1x128xf32>
      %52 = vector.broadcast %51 : vector<1x128xf32> to vector<128x128xf32>
      %53 = arith.addf %50, %52 : vector<128x128xf32>
      %54 = tpu.transpose %48, [1, 0] : vector<128x128xf32> -> vector<128x128xf32>
      %55 = arith.truncf %54 : vector<128x128xf32> to vector<128x128xbf16>
      %c0_38 = arith.constant 0 : index
      %c0_39 = arith.constant 0 : index
      %56 = vector.load %arg13[%c0_38, %c0_39] : memref<128x128xbf16, #tpu.memory_space<vmem>>, vector<128x128xbf16>
      tpu.vector_store %arg13[%c0_38, %c0_39], %55 {strides = array<i32>} : memref<128x128xbf16, #tpu.memory_space<vmem>>, vector<128x128xbf16>,
      %57 = arith.truncf %53 : vector<128x128xf32> to vector<128x128xbf16>
      %c0_40 = arith.constant 0 : index
      %c0_41 = arith.constant 0 : index
      %58 = vector.load %arg14[%c0_40, %c0_41] : memref<128x128xbf16, #tpu.memory_space<vmem>>, vector<128x128xbf16>
      tpu.vector_store %arg14[%c0_40, %c0_41], %57 {strides = array<i32>} : memref<128x128xbf16, #tpu.memory_space<vmem>>, vector<128x128xbf16>,
    } else {
    }
    %c0 = arith.constant 0 : index
    %c0_1 = arith.constant 0 : index
    %c0_2 = arith.constant 0 : index
    %3 = vector.load %arg2[%c0, %c0_1, %c0_2] : memref<1x16x128xbf16, #tpu.memory_space<vmem>>, vector<1x16x128xbf16>
    %4 = vector.shape_cast %3 : vector<1x16x128xbf16> to vector<16x128xbf16>
    %c0_3 = arith.constant 0 : index
    %c0_4 = arith.constant 0 : index
    %5 = vector.load %arg4[%c0_3, %c0_4] : memref<128x128xbf16, #tpu.memory_space<vmem>>, vector<128x128xbf16>
    %cst = arith.constant dense<0.000000e+00> : vector<16x128xf32>
    %6 = tpu.matmul %4, %5, %cst {dimension_numbers = #tpu.dot_dimension_numbers<[1], [0], [0], [1], [0, 0, 1, 1], [], []>} : vector<16x128xbf16>, vector<128x128xbf16>, vector<16x128xf32> -> vector<16x128xf32>
    %c0_5 = arith.constant 0 : index
    %c0_6 = arith.constant 0 : index
    %7 = vector.load %arg8[%c0_5, %c0_6] : memref<1x128xf32, #tpu.memory_space<vmem>>, vector<1x128xf32>
    %8 = vector.broadcast %7 : vector<1x128xf32> to vector<16x128xf32>
    %9 = arith.addf %6, %8 : vector<16x128xf32>
    %10 = arith.truncf %9 : vector<16x128xf32> to vector<16x128xbf16>
    %c0_7 = arith.constant 0 : index
    %c0_8 = arith.constant 0 : index
    %11 = vector.load %arg13[%c0_7, %c0_8] : memref<128x128xbf16, #tpu.memory_space<vmem>>, vector<128x128xbf16>
    %cst_9 = arith.constant dense<0.000000e+00> : vector<16x128xf32>
    %12 = tpu.matmul %10, %11, %cst_9 {dimension_numbers = #tpu.dot_dimension_numbers<[1], [0], [0], [1], [0, 0, 1, 1], [], []>} : vector<16x128xbf16>, vector<128x128xbf16>, vector<16x128xf32> -> vector<16x128xf32>
    %cst_10 = arith.constant 0.0883883461 : f32
    %13 = vector.broadcast %cst_10 : f32 to vector<16x128xf32>
    %14 = arith.mulf %12, %13 : vector<16x128xf32>
    %15 = tpu.iota {dimensions = array<i32: 1>} : vector<16x128xi32>
    %c10_i32 = arith.constant 10 : i32
    %16 = vector.broadcast %c10_i32 : i32 to vector<16x128xi32>
    %17 = arith.cmpi slt, %15, %16 : vector<16x128xi32>
    %cst_11 = arith.constant -1.000000e+30 : f32
    %18 = vector.broadcast %cst_11 : f32 to vector<16x128xf32>
    %19 = arith.select %17, %14, %18 : vector<16x128xi1>, vector<16x128xf32>
    %cst_12 = arith.constant dense<0xFF800000> : vector<16xf32>
    %20 = vector.multi_reduction <maximumf>, %19, %cst_12 [1] : vector<16x128xf32> to vector<16xf32>
    %21 = vector.shape_cast %20 : vector<16xf32> to vector<16x1xf32>
    %22 = vector.broadcast %21 : vector<16x1xf32> to vector<16x128xf32>
    %23 = arith.subf %19, %22 : vector<16x128xf32>
    %24 = math.exp %23 : vector<16x128xf32>
    %cst_13 = arith.constant dense<0.000000e+00> : vector<16xf32>
    %25 = vector.multi_reduction <add>, %24, %cst_13 [1] : vector<16x128xf32> to vector<16xf32>
    %26 = vector.shape_cast %25 : vector<16xf32> to vector<16x1xf32>
    %27 = tpu.reciprocal %26 {approx = true} : vector<16x1xf32> -> vector<16x1xf32>
    %28 = vector.broadcast %27 : vector<16x1xf32> to vector<16x128xf32>
    %29 = arith.mulf %24, %28 : vector<16x128xf32>
    %30 = arith.truncf %29 : vector<16x128xf32> to vector<16x128xbf16>
    %c0_14 = arith.constant 0 : index
    %c0_15 = arith.constant 0 : index
    %31 = vector.load %arg14[%c0_14, %c0_15] : memref<128x128xbf16, #tpu.memory_space<vmem>>, vector<128x128xbf16>
    %cst_16 = arith.constant dense<0.000000e+00> : vector<16x128xf32>
    %32 = tpu.matmul %30, %31, %cst_16 {dimension_numbers = #tpu.dot_dimension_numbers<[1], [0], [0], [1], [0, 0, 1, 1], [], []>} : vector<16x128xbf16>, vector<128x128xbf16>, vector<16x128xf32> -> vector<16x128xf32>
    %33 = arith.truncf %32 : vector<16x128xf32> to vector<16x128xbf16>
    %c0_17 = arith.constant 0 : index
    %c0_18 = arith.constant 0 : index
    %34 = vector.load %arg7[%c0_17, %c0_18] : memref<128x128xbf16, #tpu.memory_space<vmem>>, vector<128x128xbf16>
    %cst_19 = arith.constant dense<0.000000e+00> : vector<16x128xf32>
    %35 = tpu.matmul %33, %34, %cst_19 {dimension_numbers = #tpu.dot_dimension_numbers<[1], [0], [0], [1], [0, 0, 1, 1], [], []>} : vector<16x128xbf16>, vector<128x128xbf16>, vector<16x128xf32> -> vector<16x128xf32>
    %c0_20 = arith.constant 0 : index
    %c0_21 = arith.constant 0 : index
    %36 = vector.load %arg11[%c0_20, %c0_21] : memref<1x128xf32, #tpu.memory_space<vmem>>, vector<1x128xf32>
    %37 = vector.broadcast %36 : vector<1x128xf32> to vector<16x128xf32>
    %38 = arith.addf %35, %37 : vector<16x128xf32>
    %c0_22 = arith.constant 0 : index
    %c0_23 = arith.constant 0 : index
    %c0_24 = arith.constant 0 : index
    %39 = vector.load %arg12[%c0_22, %c0_23, %c0_24] : memref<1x16x128xf32, #tpu.memory_space<vmem>>, vector<1x16x128xf32>
    %40 = vector.shape_cast %39 : vector<1x16x128xf32> to vector<16x128xf32>
    %41 = vector.shape_cast %38 : vector<16x128xf32> to vector<1x16x128xf32>
    tpu.vector_store %arg12[%c0_22, %c0_23, %c0_24], %41 {strides = array<i32>} : memref<1x16x128xf32, #tpu.memory_space<vmem>>, vector<1x16x128xf32>,
    return
  }
  func.func @transform_0(%arg0: i32, %arg1: i32) -> (i32, i32, i32) {
    %c0_i32 = arith.constant 0 : i32
    %c0_i32_0 = arith.constant 0 : i32
    return %arg0, %arg1, %c0_i32 : i32, i32, i32
  }
  func.func @transform_1(%arg0: i32, %arg1: i32) -> (i32, i32, i32) {
    %c0_i32 = arith.constant 0 : i32
    %c0_i32_0 = arith.constant 0 : i32
    %c0_i32_1 = arith.constant 0 : i32
    return %arg0, %c0_i32, %c0_i32_0 : i32, i32, i32
  }
  func.func @transform_2(%arg0: i32, %arg1: i32) -> (i32, i32) {
    %c0_i32 = arith.constant 0 : i32
    %c0_i32_0 = arith.constant 0 : i32
    %c0_i32_1 = arith.constant 0 : i32
    return %c0_i32, %c0_i32_0 : i32, i32
  }
  func.func @transform_3(%arg0: i32, %arg1: i32) -> (i32, i32) {
    %c0_i32 = arith.constant 0 : i32
    %c0_i32_0 = arith.constant 0 : i32
    %c0_i32_1 = arith.constant 0 : i32
    return %c0_i32, %c0_i32_0 : i32, i32
  }
  func.func @transform_4(%arg0: i32, %arg1: i32) -> (i32, i32) {
    %c0_i32 = arith.constant 0 : i32
    %c0_i32_0 = arith.constant 0 : i32
    %c0_i32_1 = arith.constant 0 : i32
    return %c0_i32, %c0_i32_0 : i32, i32
  }
  func.func @transform_5(%arg0: i32, %arg1: i32) -> (i32, i32) {
    %c0_i32 = arith.constant 0 : i32
    %c0_i32_0 = arith.constant 0 : i32
    %c0_i32_1 = arith.constant 0 : i32
    return %c0_i32, %c0_i32_0 : i32, i32
  }
  func.func @transform_6(%arg0: i32, %arg1: i32) -> (i32, i32) {
    %c0_i32 = arith.constant 0 : i32
    %c0_i32_0 = arith.constant 0 : i32
    %c0_i32_1 = arith.constant 0 : i32
    return %c0_i32, %c0_i32_0 : i32, i32
  }
  func.func @transform_7(%arg0: i32, %arg1: i32) -> (i32, i32) {
    %c0_i32 = arith.constant 0 : i32
    %c0_i32_0 = arith.constant 0 : i32
    %c0_i32_1 = arith.constant 0 : i32
    return %c0_i32, %c0_i32_0 : i32, i32
  }
  func.func @transform_8(%arg0: i32, %arg1: i32) -> (i32, i32) {
    %c0_i32 = arith.constant 0 : i32
    %c0_i32_0 = arith.constant 0 : i32
    %c0_i32_1 = arith.constant 0 : i32
    return %c0_i32, %c0_i32_0 : i32, i32
  }
  func.func @transform_9(%arg0: i32, %arg1: i32) -> (i32, i32) {
    %c0_i32 = arith.constant 0 : i32
    %c0_i32_0 = arith.constant 0 : i32
    %c0_i32_1 = arith.constant 0 : i32
    return %c0_i32, %c0_i32_0 : i32, i32
  }
  func.func @transform_10(%arg0: i32, %arg1: i32) -> (i32, i32, i32) {
    %c0_i32 = arith.constant 0 : i32
    %c0_i32_0 = arith.constant 0 : i32
    return %arg0, %arg1, %c0_i32 : i32, i32, i32
  }
}

module attributes {stable_mosaic.version = 11 : i64} {
  func.func @simplified_attention_kernel(%arg0: i32, %arg1: i32, %arg2: memref<1x16x128xbf16, #tpu.memory_space<vmem>>, %arg3: memref<1x128x128xbf16, #tpu.memory_space<vmem>>, %arg4: memref<128x128xbf16, #tpu.memory_space<vmem>>, %arg5: memref<128x128xbf16, #tpu.memory_space<vmem>>, %arg6: memref<128x128xbf16, #tpu.memory_space<vmem>>, %arg7: memref<128x128xbf16, #tpu.memory_space<vmem>>, %arg8: memref<1x128xf32, #tpu.memory_space<vmem>>, %arg9: memref<1x128xf32, #tpu.memory_space<vmem>>, %arg10: memref<1x128xf32, #tpu.memory_space<vmem>>, %arg11: memref<1x128xf32, #tpu.memory_space<vmem>>, %arg12: memref<1x16x128xf32, #tpu.memory_space<vmem>>, %arg13: memref<128x128xbf16, #tpu.memory_space<vmem>>, %arg14: memref<128x128xbf16, #tpu.memory_space<vmem>>) attributes {dimension_semantics = [#tpu.dimension_semantics<parallel>, #tpu.dimension_semantics<arbitrary>], iteration_bounds = array<i64: 2, 1>, scalar_prefetch = 0 : i64, scratch_operands = 2 : i64, tpu.core_type = #tpu.core_type<tc>, window_params = [{transform_indices = @transform_0, window_bounds = array<i64: 1, 16, 128>}, {transform_indices = @transform_1, window_bounds = array<i64: 1, 128, 128>}, {pipeline_mode = #tpu.pipeline_mode<synchronous>, transform_indices = @transform_2, window_bounds = array<i64: 128, 128>}, {pipeline_mode = #tpu.pipeline_mode<synchronous>, transform_indices = @transform_3, window_bounds = array<i64: 128, 128>}, {pipeline_mode = #tpu.pipeline_mode<synchronous>, transform_indices = @transform_4, window_bounds = array<i64: 128, 128>}, {pipeline_mode = #tpu.pipeline_mode<synchronous>, transform_indices = @transform_5, window_bounds = array<i64: 128, 128>}, {pipeline_mode = #tpu.pipeline_mode<synchronous>, transform_indices = @transform_6, window_bounds = array<i64: 1, 128>}, {pipeline_mode = #tpu.pipeline_mode<synchronous>, transform_indices = @transform_7, window_bounds = array<i64: 1, 128>}, {pipeline_mode = #tpu.pipeline_mode<synchronous>, transform_indices = @transform_8, window_bounds = array<i64: 1, 128>}, {pipeline_mode = #tpu.pipeline_mode<synchronous>, transform_indices = @transform_9, window_bounds = array<i64: 1, 128>}, {transform_indices = @transform_10, window_bounds = array<i64: 1, 16, 128>}]} {
    %c0_i32 = arith.constant 0 : i32
    %0 = arith.cmpi eq, %arg1, %c0_i32 : i32
    %1 = arith.extui %0 : i1 to i32
    %c0_i32_0 = arith.constant 0 : i32
    %2 = arith.cmpi ne, %1, %c0_i32_0 : i32
    scf.if %2 {
      %c0_25 = arith.constant 0 : index
      %c0_26 = arith.constant 0 : index
      %c0_27 = arith.constant 0 : index
      %42 = vector.load %arg3[%c0_25, %c0_26, %c0_27] : memref<1x128x128xbf16, #tpu.memory_space<vmem>>, vector<1x128x128xbf16>
      %43 = vector.shape_cast %42 : vector<1x128x128xbf16> to vector<128x128xbf16>
      %c0_28 = arith.constant 0 : index
      %c0_29 = arith.constant 0 : index
      %44 = vector.load %arg5[%c0_28, %c0_29] : memref<128x128xbf16, #tpu.memory_space<vmem>>, vector<128x128xbf16>
      %cst_30 = arith.constant dense<0.000000e+00> : vector<128x128xf32>
      %45 = tpu.matmul %43, %44, %cst_30 {dimension_numbers = #tpu.dot_dimension_numbers<[1], [0], [0], [1], [0, 0, 1, 1], [], []>} : vector<128x128xbf16>, vector<128x128xbf16>, vector<128x128xf32> -> vector<128x128xf32>
      %c0_31 = arith.constant 0 : index
      %c0_32 = arith.constant 0 : index
      %46 = vector.load %arg9[%c0_31, %c0_32] : memref<1x128xf32, #tpu.memory_space<vmem>>, vector<1x128xf32>
      %47 = vector.broadcast %46 : vector<1x128xf32> to vector<128x128xf32>
      %48 = arith.addf %45, %47 : vector<128x128xf32>
      %c0_33 = arith.constant 0 : index
      %c0_34 = arith.constant 0 : index
      %49 = vector.load %arg6[%c0_33, %c0_34] : memref<128x128xbf16, #tpu.memory_space<vmem>>, vector<128x128xbf16>
      %cst_35 = arith.constant dense<0.000000e+00> : vector<128x128xf32>
      %50 = tpu.matmul %43, %49, %cst_35 {dimension_numbers = #tpu.dot_dimension_numbers<[1], [0], [0], [1], [0, 0, 1, 1], [], []>} : vector<128x128xbf16>, vector<128x128xbf16>, vector<128x128xf32> -> vector<128x128xf32>
      %c0_36 = arith.constant 0 : index
      %c0_37 = arith.constant 0 : index
      %51 = vector.load %arg10[%c0_36, %c0_37] : memref<1x128xf32, #tpu.memory_space<vmem>>, vector<1x128xf32>
      %52 = vector.broadcast %51 : vector<1x128xf32> to vector<128x128xf32>
      %53 = arith.addf %50, %52 : vector<128x128xf32>
      %54 = tpu.transpose %48, [1, 0] : vector<128x128xf32> -> vector<128x128xf32>
      %55 = arith.truncf %54 : vector<128x128xf32> to vector<128x128xbf16>
      %c0_38 = arith.constant 0 : index
      %c0_39 = arith.constant 0 : index
      %56 = vector.load %arg13[%c0_38, %c0_39] : memref<128x128xbf16, #tpu.memory_space<vmem>>, vector<128x128xbf16>
      tpu.vector_store %arg13[%c0_38, %c0_39], %55 {strides = array<i32>} : memref<128x128xbf16, #tpu.memory_space<vmem>>, vector<128x128xbf16>,
      %57 = arith.truncf %53 : vector<128x128xf32> to vector<128x128xbf16>
      %c0_40 = arith.constant 0 : index
      %c0_41 = arith.constant 0 : index
      %58 = vector.load %arg14[%c0_40, %c0_41] : memref<128x128xbf16, #tpu.memory_space<vmem>>, vector<128x128xbf16>
      tpu.vector_store %arg14[%c0_40, %c0_41], %57 {strides = array<i32>} : memref<128x128xbf16, #tpu.memory_space<vmem>>, vector<128x128xbf16>,
    } else {
    }
    %c0 = arith.constant 0 : index
    %c0_1 = arith.constant 0 : index
    %c0_2 = arith.constant 0 : index
    %3 = vector.load %arg2[%c0, %c0_1, %c0_2] : memref<1x16x128xbf16, #tpu.memory_space<vmem>>, vector<1x16x128xbf16>
    %4 = vector.shape_cast %3 : vector<1x16x128xbf16> to vector<16x128xbf16>
    %c0_3 = arith.constant 0 : index
    %c0_4 = arith.constant 0 : index
    %5 = vector.load %arg4[%c0_3, %c0_4] : memref<128x128xbf16, #tpu.memory_space<vmem>>, vector<128x128xbf16>
    %cst = arith.constant dense<0.000000e+00> : vector<16x128xf32>
    %6 = tpu.matmul %4, %5, %cst {dimension_numbers = #tpu.dot_dimension_numbers<[1], [0], [0], [1], [0, 0, 1, 1], [], []>} : vector<16x128xbf16>, vector<128x128xbf16>, vector<16x128xf32> -> vector<16x128xf32>
    %c0_5 = arith.constant 0 : index
    %c0_6 = arith.constant 0 : index
    %7 = vector.load %arg8[%c0_5, %c0_6] : memref<1x128xf32, #tpu.memory_space<vmem>>, vector<1x128xf32>
    %8 = vector.broadcast %7 : vector<1x128xf32> to vector<16x128xf32>
    %9 = arith.addf %6, %8 : vector<16x128xf32>
    %10 = arith.truncf %9 : vector<16x128xf32> to vector<16x128xbf16>
    %c0_7 = arith.constant 0 : index
    %c0_8 = arith.constant 0 : index
    %11 = vector.load %arg13[%c0_7, %c0_8] : memref<128x128xbf16, #tpu.memory_space<vmem>>, vector<128x128xbf16>
    %cst_9 = arith.constant dense<0.000000e+00> : vector<16x128xf32>
    %12 = tpu.matmul %10, %11, %cst_9 {dimension_numbers = #tpu.dot_dimension_numbers<[1], [0], [0], [1], [0, 0, 1, 1], [], []>} : vector<16x128xbf16>, vector<128x128xbf16>, vector<16x128xf32> -> vector<16x128xf32>
    %cst_10 = arith.constant 0.0883883461 : f32
    %13 = vector.broadcast %cst_10 : f32 to vector<16x128xf32>
    %14 = arith.mulf %12, %13 : vector<16x128xf32>
    %15 = tpu.iota {dimensions = array<i32: 1>} : vector<16x128xi32>
    %c10_i32 = arith.constant 10 : i32
    %16 = vector.broadcast %c10_i32 : i32 to vector<16x128xi32>
    %17 = arith.cmpi slt, %15, %16 : vector<16x128xi32>
    %cst_11 = arith.constant -1.000000e+30 : f32
    %18 = vector.broadcast %cst_11 : f32 to vector<16x128xf32>
    %19 = arith.select %17, %14, %18 : vector<16x128xi1>, vector<16x128xf32>
    %cst_12 = arith.constant dense<0xFF800000> : vector<16xf32>
    %20 = vector.multi_reduction <maximumf>, %19, %cst_12 [1] : vector<16x128xf32> to vector<16xf32>
    %21 = vector.shape_cast %20 : vector<16xf32> to vector<16x1xf32>
    %22 = vector.broadcast %21 : vector<16x1xf32> to vector<16x128xf32>
    %23 = arith.subf %19, %22 : vector<16x128xf32>
    %24 = math.exp %23 : vector<16x128xf32>
    %cst_13 = arith.constant dense<0.000000e+00> : vector<16xf32>
    %25 = vector.multi_reduction <add>, %24, %cst_13 [1] : vector<16x128xf32> to vector<16xf32>
    %26 = vector.shape_cast %25 : vector<16xf32> to vector<16x1xf32>
    %27 = tpu.reciprocal %26 {approx = true} : vector<16x1xf32> -> vector<16x1xf32>
    %28 = vector.broadcast %27 : vector<16x1xf32> to vector<16x128xf32>
    %29 = arith.mulf %24, %28 : vector<16x128xf32>
    %30 = arith.truncf %29 : vector<16x128xf32> to vector<16x128xbf16>
    %c0_14 = arith.constant 0 : index
    %c0_15 = arith.constant 0 : index
    %31 = vector.load %arg14[%c0_14, %c0_15] : memref<128x128xbf16, #tpu.memory_space<vmem>>, vector<128x128xbf16>
    %cst_16 = arith.constant dense<0.000000e+00> : vector<16x128xf32>
    %32 = tpu.matmul %30, %31, %cst_16 {dimension_numbers = #tpu.dot_dimension_numbers<[1], [0], [0], [1], [0, 0, 1, 1], [], []>} : vector<16x128xbf16>, vector<128x128xbf16>, vector<16x128xf32> -> vector<16x128xf32>
    %33 = arith.truncf %32 : vector<16x128xf32> to vector<16x128xbf16>
    %c0_17 = arith.constant 0 : index
    %c0_18 = arith.constant 0 : index
    %34 = vector.load %arg7[%c0_17, %c0_18] : memref<128x128xbf16, #tpu.memory_space<vmem>>, vector<128x128xbf16>
    %cst_19 = arith.constant dense<0.000000e+00> : vector<16x128xf32>
    %35 = tpu.matmul %33, %34, %cst_19 {dimension_numbers = #tpu.dot_dimension_numbers<[1], [0], [0], [1], [0, 0, 1, 1], [], []>} : vector<16x128xbf16>, vector<128x128xbf16>, vector<16x128xf32> -> vector<16x128xf32>
    %c0_20 = arith.constant 0 : index
    %c0_21 = arith.constant 0 : index
    %36 = vector.load %arg11[%c0_20, %c0_21] : memref<1x128xf32, #tpu.memory_space<vmem>>, vector<1x128xf32>
    %37 = vector.broadcast %36 : vector<1x128xf32> to vector<16x128xf32>
    %38 = arith.addf %35, %37 : vector<16x128xf32>
    %c0_22 = arith.constant 0 : index
    %c0_23 = arith.constant 0 : index
    %c0_24 = arith.constant 0 : index
    %39 = vector.load %arg12[%c0_22, %c0_23, %c0_24] : memref<1x16x128xf32, #tpu.memory_space<vmem>>, vector<1x16x128xf32>
    %40 = vector.shape_cast %39 : vector<1x16x128xf32> to vector<16x128xf32>
    %41 = vector.shape_cast %38 : vector<16x128xf32> to vector<1x16x128xf32>
    tpu.vector_store %arg12[%c0_22, %c0_23, %c0_24], %41 {strides = array<i32>} : memref<1x16x128xf32, #tpu.memory_space<vmem>>, vector<1x16x128xf32>,
    return
  }
  func.func @transform_0(%arg0: i32, %arg1: i32) -> (i32, i32, i32) {
    %c0_i32 = arith.constant 0 : i32
    %c0_i32_0 = arith.constant 0 : i32
    return %arg0, %arg1, %c0_i32 : i32, i32, i32
  }
  func.func @transform_1(%arg0: i32, %arg1: i32) -> (i32, i32, i32) {
    %c0_i32 = arith.constant 0 : i32
    %c0_i32_0 = arith.constant 0 : i32
    %c0_i32_1 = arith.constant 0 : i32
    return %arg0, %c0_i32, %c0_i32_0 : i32, i32, i32
  }
  func.func @transform_2(%arg0: i32, %arg1: i32) -> (i32, i32) {
    %c0_i32 = arith.constant 0 : i32
    %c0_i32_0 = arith.constant 0 : i32
    %c0_i32_1 = arith.constant 0 : i32
    return %c0_i32, %c0_i32_0 : i32, i32
  }
  func.func @transform_3(%arg0: i32, %arg1: i32) -> (i32, i32) {
    %c0_i32 = arith.constant 0 : i32
    %c0_i32_0 = arith.constant 0 : i32
    %c0_i32_1 = arith.constant 0 : i32
    return %c0_i32, %c0_i32_0 : i32, i32
  }
  func.func @transform_4(%arg0: i32, %arg1: i32) -> (i32, i32) {
    %c0_i32 = arith.constant 0 : i32
    %c0_i32_0 = arith.constant 0 : i32
    %c0_i32_1 = arith.constant 0 : i32
    return %c0_i32, %c0_i32_0 : i32, i32
  }
  func.func @transform_5(%arg0: i32, %arg1: i32) -> (i32, i32) {
    %c0_i32 = arith.constant 0 : i32
    %c0_i32_0 = arith.constant 0 : i32
    %c0_i32_1 = arith.constant 0 : i32
    return %c0_i32, %c0_i32_0 : i32, i32
  }
  func.func @transform_6(%arg0: i32, %arg1: i32) -> (i32, i32) {
    %c0_i32 = arith.constant 0 : i32
    %c0_i32_0 = arith.constant 0 : i32
    %c0_i32_1 = arith.constant 0 : i32
    return %c0_i32, %c0_i32_0 : i32, i32
  }
  func.func @transform_7(%arg0: i32, %arg1: i32) -> (i32, i32) {
    %c0_i32 = arith.constant 0 : i32
    %c0_i32_0 = arith.constant 0 : i32
    %c0_i32_1 = arith.constant 0 : i32
    return %c0_i32, %c0_i32_0 : i32, i32
  }
  func.func @transform_8(%arg0: i32, %arg1: i32) -> (i32, i32) {
    %c0_i32 = arith.constant 0 : i32
    %c0_i32_0 = arith.constant 0 : i32
    %c0_i32_1 = arith.constant 0 : i32
    return %c0_i32, %c0_i32_0 : i32, i32
  }
  func.func @transform_9(%arg0: i32, %arg1: i32) -> (i32, i32) {
    %c0_i32 = arith.constant 0 : i32
    %c0_i32_0 = arith.constant 0 : i32
    %c0_i32_1 = arith.constant 0 : i32
    return %c0_i32, %c0_i32_0 : i32, i32
  }
  func.func @transform_10(%arg0: i32, %arg1: i32) -> (i32, i32, i32) {
    %c0_i32 = arith.constant 0 : i32
    %c0_i32_0 = arith.constant 0 : i32
    return %arg0, %arg1, %c0_i32 : i32, i32, i32
  }
}

</mosaic_0001>

<llo_original>
// kernel: tpu_custom_call.1
$region0: #{tpu_custom_call.1}
  #allocation0 [shape = 'u32[]', space=smem, size = 0x4, offset = 0x4, fixed_abs, tag = 'smem constant byte address 0x4 - core index']
  #allocation1 [shape = 'u32[72,128]{1,0:T(1,128)}', space=vmem, size = 0x9000, scoped, tag = 'internal scratch']
  #allocation2 [shape = 'bf16[128,128]{1,0:T(8,128)(2,1)}', space=vmem, size = 0x8000, scoped, tag = 'scratch operand']
  #allocation3 [shape = 'bf16[128,128]{1,0:T(8,128)(2,1)}', space=vmem, size = 0x8000, scoped, tag = 'scratch operand']
  %s0 = inlined_call_operand.hbm [shape: bf16[2,16,128], index: 0, kind: input, shape index: {}]
  %s1 = inlined_call_operand.hbm [shape: bf16[2,128,128], index: 1, kind: input, shape index: {}]
  %s2 = inlined_call_operand.hbm [shape: bf16[128,128], index: 2, kind: input, shape index: {}]
  %s3 = inlined_call_operand.hbm [shape: bf16[128,128], index: 3, kind: input, shape index: {}]
  %s4 = inlined_call_operand.hbm [shape: bf16[128,128], index: 4, kind: input, shape index: {}]
  %s5 = inlined_call_operand.hbm [shape: bf16[128,128], index: 5, kind: input, shape index: {}]
  %s6 = inlined_call_operand.vmem [shape: f32[1,128], index: 6, kind: input, shape index: {}]
  %s7 = inlined_call_operand.vmem [shape: f32[1,128], index: 7, kind: input, shape index: {}]
  %s8 = inlined_call_operand.vmem [shape: f32[1,128], index: 8, kind: input, shape index: {}]
  %s9 = inlined_call_operand.vmem [shape: f32[1,128], index: 9, kind: input, shape index: {}]
  %s10 = inlined_call_operand.hbm [shape: f32[2,16,128], index: 10, kind: output, shape index: {}]
  %s11 = sld [smem:[#allocation0]]
  $region101: #{tpu_custom_call.1} parent=0
    _
  %s13 = ssub.s32 1, %s11
  %s14 = scalar_select 0, %s13, %s11
  $region1: #{tpu_custom_call.1} parent=0
    #allocation4 [shape = 'u8[8192]{0}', space=vmem, size = 0x2000, scoped, tag = 'input window, operand 0']
    #allocation5 [shape = 's32[2]{0}', space=sflag, size = 0x8, scoped, tag = 'scoped memory for tpu_custom_call.1']
    #allocation6 [shape = 's32[2]{0}', space=sflag, size = 0x8, scoped, tag = 'scoped memory for tpu_custom_call.1']
    #allocation7 [shape = 'u8[65536]{0}', space=vmem, size = 0x10000, scoped, tag = 'input window, operand 1']
    #allocation8 [shape = 's32[2]{0}', space=sflag, size = 0x8, scoped, tag = 'scoped memory for tpu_custom_call.1']
    #allocation9 [shape = 'u8[32768]{0}', space=vmem, size = 0x8000, scoped, tag = 'input window, operand 2, single buffered']
    #allocation10 [shape = 'u8[32768]{0}', space=vmem, size = 0x8000, scoped, tag = 'input window, operand 3, single buffered']
    #allocation11 [shape = 's32[1]{0}', space=sflag, size = 0x4, scoped, tag = 'scoped memory for tpu_custom_call.1']
    #allocation12 [shape = 'u8[32768]{0}', space=vmem, size = 0x8000, scoped, tag = 'input window, operand 4, single buffered']
    #allocation13 [shape = 'u8[32768]{0}', space=vmem, size = 0x8000, scoped, tag = 'input window, operand 5, single buffered']
    #allocation14 [shape = 's32[1]{0}', space=sflag, size = 0x4, scoped, tag = 'scoped memory for tpu_custom_call.1']
    #allocation15 [shape = 'u8[16384]{0}', space=vmem, size = 0x4000, scoped, tag = 'output window, operand 0']
    %15 = vsyncpa [#allocation5], 0
    %s16 = scalar_lea.sflag [#allocation5], 1
    %17 = vsyncpa %s16, 0
    %18 = vsyncpa [#allocation8], 0
    %s19 = scalar_lea.sflag [#allocation8], 1
    %20 = vsyncpa %s19, 0
    %21 = vsyncpa [#allocation11], 0
    %22 = vsyncpa [#allocation14], 0
    %23 = vsyncpa [#allocation6], 0
    %s24 = scalar_lea.sflag [#allocation6], 1
    %25 = vsyncpa %s24, 0
    loop: start=0, step=1, limit=4
    $region2: #{tpu_custom_call.1} parent=1 // loop_pre_header
      _
    $region3: #{tpu_custom_call.1} parent=1 // loop_header
      %s27 = sphi 0, %s31
      %p28 = scmp.ge.s32.totalorder %s27, 4
      %s34 = sphi 0, %s46
      %s35 = sphi 0, %s42
      %s36 = sphi 0, %s34
      %s37 = sphi 0, %s35
      %s38 = sphi 0, %s36
      %s39 = sphi 0, %s37
      %s51 = sphi 0, %s53
      %s54 = sphi 0, %s51
      %s55 = sphi 0, %s54
      %s71 = sphi 0, %s55
      %s77 = sphi 0, %s79
      %s80 = sphi 0, %s77
      %s81 = sphi 0, %s80
      %s97 = sphi 0, %s81
      %s101 = sphi 0, %s101
      %s103 = sphi 0, %s101
      %s104 = sphi 0, %s103
      %s118 = sphi 0, %s104
      %s122 = sphi 0, %s122
      %s124 = sphi 0, %s122
      %s125 = sphi 0, %s124
      %s139 = sphi 0, %s125
      %s143 = sphi 0, %s143
      %s145 = sphi 0, %s143
      %s146 = sphi 0, %s145
      %s160 = sphi 0, %s146
      %s164 = sphi 0, %s164
      %s166 = sphi 0, %s164
      %s167 = sphi 0, %s166
      %s181 = sphi 0, %s167
      %s185 = sphi 0, %s185
      %s187 = sphi 0, %s185
      %s188 = sphi 0, %s187
      %s202 = sphi 0, %s188
      %s206 = sphi 0, %s206
      %s208 = sphi 0, %s206
      %s209 = sphi 0, %s208
      %s223 = sphi 0, %s209
      %s227 = sphi 0, %s227
      %s229 = sphi 0, %s227
      %s230 = sphi 0, %s229
      %s244 = sphi 0, %s230
      %s248 = sphi 0, %s248
      %s250 = sphi 0, %s248
      %s251 = sphi 0, %s250
      %s265 = sphi 0, %s251
      %s273 = sphi 0, %s275
      %s276 = sphi 0, %s273
      %s277 = sphi 0, %s276
      %s293 = sphi 0, %s277
    $region4: #{tpu_custom_call.1} parent=1 // loop_header_branch
      %30 = sbr.rel (%p28) target = $region8
    $region5: #{tpu_custom_call.1} parent=1 // loop_body
      %s32 = ssub.s32 %s27, 1
      %s33 = ssub.s32 %s27, 2
      %s40 = sadd.s32 1, %s35
      %p41 = scmp.ge.s32.totalorder %s40, 1
      %s42 = scalar_select %p41, 0, %s40
      %s43 = sadd.s32 1, %s34
      %s44 = scalar_select %p41, %s43, %s34
      %p45 = scmp.ge.s32.totalorder %s44, 2
      %s46 = scalar_select %p45, 0, %s44
      %s47 = ssub.s32 %s34, %s46
      %s48 = ssub.s32 %s35, %s42
      %s49 = sor.u32 %s47, %s48
      %p50 = scmp.eq.s32.totalorder %s49, 0
      %s52 = sadd.s32 %s51, 1
      %s53 = scalar_select %p50, %s51, %s52
      %p56 = pneg %p50
      %p57 = scmp.eq.s32.totalorder %s27, 1
      %p58 = por %p56, %p57
      %p59 = scmp.ne.s32.totalorder %s51, %s54
      %p60 = scmp.eq.s32.totalorder %s27, 0
      %p61 = por %p59, %p60
      %p62 = scmp.ne.s32.totalorder %s51, %s54
      %p63 = scmp.eq.s32.totalorder %s32, 1
      %p64 = por %p62, %p63
      %p65 = scmp.ne.s32.totalorder %s54, %s55
      %p66 = scmp.eq.s32.totalorder %s32, 0
      %p67 = por %p65, %p66
      %p68 = scmp.ne.s32.totalorder %s54, %s55
      %p69 = scmp.eq.s32.totalorder %s33, 1
      %p70 = por %p68, %p69
      %p72 = scmp.ne.s32.totalorder %s55, %s71
      %p73 = scmp.eq.s32.totalorder %s33, 0
      %p74 = por %p72, %p73
      %s75 = ssub.s32 %s34, %s46
      %p76 = scmp.eq.s32.totalorder %s75, 0
      %s78 = sadd.s32 %s77, 1
      %s79 = scalar_select %p76, %s77, %s78
      %p82 = pneg %p76
      %p83 = scmp.eq.s32.totalorder %s27, 1
      %p84 = por %p82, %p83
      %p85 = scmp.ne.s32.totalorder %s77, %s80
      %p86 = scmp.eq.s32.totalorder %s27, 0
      %p87 = por %p85, %p86
      %p88 = scmp.ne.s32.totalorder %s77, %s80
      %p89 = scmp.eq.s32.totalorder %s32, 1
      %p90 = por %p88, %p89
      %p91 = scmp.ne.s32.totalorder %s80, %s81
      %p92 = scmp.eq.s32.totalorder %s32, 0
      %p93 = por %p91, %p92
      %p94 = scmp.ne.s32.totalorder %s80, %s81
      %p95 = scmp.eq.s32.totalorder %s33, 1
      %p96 = por %p94, %p95
      %p98 = scmp.ne.s32.totalorder %s81, %s97
      %p99 = scmp.eq.s32.totalorder %s33, 0
      %p100 = por %p98, %p99
      %s102 = sadd.s32 %s101, 1
      %p105 = scmp.eq.s32.totalorder %s27, 1
      %p106 = scmp.ne.s32.totalorder %s101, %s103
      %p107 = scmp.eq.s32.totalorder %s27, 0
      %p108 = por %p106, %p107
      %p109 = scmp.ne.s32.totalorder %s101, %s103
      %p110 = scmp.eq.s32.totalorder %s32, 1
      %p111 = por %p109, %p110
      %p112 = scmp.ne.s32.totalorder %s103, %s104
      %p113 = scmp.eq.s32.totalorder %s32, 0
      %p114 = por %p112, %p113
      %p115 = scmp.ne.s32.totalorder %s103, %s104
      %p116 = scmp.eq.s32.totalorder %s33, 1
      %p117 = por %p115, %p116
      %p119 = scmp.ne.s32.totalorder %s104, %s118
      %p120 = scmp.eq.s32.totalorder %s33, 0
      %p121 = por %p119, %p120
      %s123 = sadd.s32 %s122, 1
      %p126 = scmp.eq.s32.totalorder %s27, 1
      %p127 = scmp.ne.s32.totalorder %s122, %s124
      %p128 = scmp.eq.s32.totalorder %s27, 0
      %p129 = por %p127, %p128
      %p130 = scmp.ne.s32.totalorder %s122, %s124
      %p131 = scmp.eq.s32.totalorder %s32, 1
      %p132 = por %p130, %p131
      %p133 = scmp.ne.s32.totalorder %s124, %s125
      %p134 = scmp.eq.s32.totalorder %s32, 0
      %p135 = por %p133, %p134
      %p136 = scmp.ne.s32.totalorder %s124, %s125
      %p137 = scmp.eq.s32.totalorder %s33, 1
      %p138 = por %p136, %p137
      %p140 = scmp.ne.s32.totalorder %s125, %s139
      %p141 = scmp.eq.s32.totalorder %s33, 0
      %p142 = por %p140, %p141
      %s144 = sadd.s32 %s143, 1
      %p147 = scmp.eq.s32.totalorder %s27, 1
      %p148 = scmp.ne.s32.totalorder %s143, %s145
      %p149 = scmp.eq.s32.totalorder %s27, 0
      %p150 = por %p148, %p149
      %p151 = scmp.ne.s32.totalorder %s143, %s145
      %p152 = scmp.eq.s32.totalorder %s32, 1
      %p153 = por %p151, %p152
      %p154 = scmp.ne.s32.totalorder %s145, %s146
      %p155 = scmp.eq.s32.totalorder %s32, 0
      %p156 = por %p154, %p155
      %p157 = scmp.ne.s32.totalorder %s145, %s146
      %p158 = scmp.eq.s32.totalorder %s33, 1
      %p159 = por %p157, %p158
      %p161 = scmp.ne.s32.totalorder %s146, %s160
      %p162 = scmp.eq.s32.totalorder %s33, 0
      %p163 = por %p161, %p162
      %s165 = sadd.s32 %s164, 1
      %p168 = scmp.eq.s32.totalorder %s27, 1
      %p169 = scmp.ne.s32.totalorder %s164, %s166
      %p170 = scmp.eq.s32.totalorder %s27, 0
      %p171 = por %p169, %p170
      %p172 = scmp.ne.s32.totalorder %s164, %s166
      %p173 = scmp.eq.s32.totalorder %s32, 1
      %p174 = por %p172, %p173
      %p175 = scmp.ne.s32.totalorder %s166, %s167
      %p176 = scmp.eq.s32.totalorder %s32, 0
      %p177 = por %p175, %p176
      %p178 = scmp.ne.s32.totalorder %s166, %s167
      %p179 = scmp.eq.s32.totalorder %s33, 1
      %p180 = por %p178, %p179
      %p182 = scmp.ne.s32.totalorder %s167, %s181
      %p183 = scmp.eq.s32.totalorder %s33, 0
      %p184 = por %p182, %p183
      %s186 = sadd.s32 %s185, 1
      %p189 = scmp.eq.s32.totalorder %s27, 1
      %p190 = scmp.ne.s32.totalorder %s185, %s187
      %p191 = scmp.eq.s32.totalorder %s27, 0
      %p192 = por %p190, %p191
      %p193 = scmp.ne.s32.totalorder %s185, %s187
      %p194 = scmp.eq.s32.totalorder %s32, 1
      %p195 = por %p193, %p194
      %p196 = scmp.ne.s32.totalorder %s187, %s188
      %p197 = scmp.eq.s32.totalorder %s32, 0
      %p198 = por %p196, %p197
      %p199 = scmp.ne.s32.totalorder %s187, %s188
      %p200 = scmp.eq.s32.totalorder %s33, 1
      %p201 = por %p199, %p200
      %p203 = scmp.ne.s32.totalorder %s188, %s202
      %p204 = scmp.eq.s32.totalorder %s33, 0
      %p205 = por %p203, %p204
      %s207 = sadd.s32 %s206, 1
      %p210 = scmp.eq.s32.totalorder %s27, 1
      %p211 = scmp.ne.s32.totalorder %s206, %s208
      %p212 = scmp.eq.s32.totalorder %s27, 0
      %p213 = por %p211, %p212
      %p214 = scmp.ne.s32.totalorder %s206, %s208
      %p215 = scmp.eq.s32.totalorder %s32, 1
      %p216 = por %p214, %p215
      %p217 = scmp.ne.s32.totalorder %s208, %s209
      %p218 = scmp.eq.s32.totalorder %s32, 0
      %p219 = por %p217, %p218
      %p220 = scmp.ne.s32.totalorder %s208, %s209
      %p221 = scmp.eq.s32.totalorder %s33, 1
      %p222 = por %p220, %p221
      %p224 = scmp.ne.s32.totalorder %s209, %s223
      %p225 = scmp.eq.s32.totalorder %s33, 0
      %p226 = por %p224, %p225
      %s228 = sadd.s32 %s227, 1
      %p231 = scmp.eq.s32.totalorder %s27, 1
      %p232 = scmp.ne.s32.totalorder %s227, %s229
      %p233 = scmp.eq.s32.totalorder %s27, 0
      %p234 = por %p232, %p233
      %p235 = scmp.ne.s32.totalorder %s227, %s229
      %p236 = scmp.eq.s32.totalorder %s32, 1
      %p237 = por %p235, %p236
      %p238 = scmp.ne.s32.totalorder %s229, %s230
      %p239 = scmp.eq.s32.totalorder %s32, 0
      %p240 = por %p238, %p239
      %p241 = scmp.ne.s32.totalorder %s229, %s230
      %p242 = scmp.eq.s32.totalorder %s33, 1
      %p243 = por %p241, %p242
      %p245 = scmp.ne.s32.totalorder %s230, %s244
      %p246 = scmp.eq.s32.totalorder %s33, 0
      %p247 = por %p245, %p246
      %s249 = sadd.s32 %s248, 1
      %p252 = scmp.eq.s32.totalorder %s27, 1
      %p253 = scmp.ne.s32.totalorder %s248, %s250
      %p254 = scmp.eq.s32.totalorder %s27, 0
      %p255 = por %p253, %p254
      %p256 = scmp.ne.s32.totalorder %s248, %s250
      %p257 = scmp.eq.s32.totalorder %s32, 1
      %p258 = por %p256, %p257
      %p259 = scmp.ne.s32.totalorder %s250, %s251
      %p260 = scmp.eq.s32.totalorder %s32, 0
      %p261 = por %p259, %p260
      %p262 = scmp.ne.s32.totalorder %s250, %s251
      %p263 = scmp.eq.s32.totalorder %s33, 1
      %p264 = por %p262, %p263
      %p266 = scmp.ne.s32.totalorder %s251, %s265
      %p267 = scmp.eq.s32.totalorder %s33, 0
      %p268 = por %p266, %p267
      %s269 = ssub.s32 %s34, %s46
      %s270 = ssub.s32 %s35, %s42
      %s271 = sor.u32 %s269, %s270
      %p272 = scmp.eq.s32.totalorder %s271, 0
      %s274 = sadd.s32 %s273, 1
      %s275 = scalar_select %p272, %s273, %s274
      %p278 = pneg %p272
      %p279 = scmp.eq.s32.totalorder %s27, 1
      %p280 = por %p278, %p279
      %p281 = scmp.ne.s32.totalorder %s273, %s276
      %p282 = scmp.eq.s32.totalorder %s27, 0
      %p283 = por %p281, %p282
      %p284 = scmp.ne.s32.totalorder %s273, %s276
      %p285 = scmp.eq.s32.totalorder %s32, 1
      %p286 = por %p284, %p285
      %p287 = scmp.ne.s32.totalorder %s276, %s277
      %p288 = scmp.eq.s32.totalorder %s32, 0
      %p289 = por %p287, %p288
      %p290 = scmp.ne.s32.totalorder %s276, %s277
      %p291 = scmp.eq.s32.totalorder %s33, 1
      %p292 = por %p290, %p291
      %p294 = scmp.ne.s32.totalorder %s277, %s293
      %p295 = scmp.eq.s32.totalorder %s33, 0
      %p296 = por %p294, %p295
      %p297 = scmp.le.s32.totalorder 1, %s27
      %p298 = scmp.lt.s32.totalorder %s27, 3
      %p299 = pnand %p297, %p298
      %p300 = pneg %p299
      // Predicated region
      $region9: #{tpu_custom_call.1} parent=5 // pred_check
        _
      $region10: #{tpu_custom_call.1} parent=5 // pred_check_branch
        %302 = sbr.rel (%p299) target = $region12
      $region11: #{tpu_custom_call.1} parent=5 // pred_region
        %s303 = ssub.s32 %s27, 1
        // Predicated region
        $region13: #{tpu_custom_call.1} parent=11 // pred_check
          %p304 = pneg %p114
        $region14: #{tpu_custom_call.1} parent=11 // pred_check_branch
          %306 = sbr.rel (%p304) target = $region16
        $region15: #{tpu_custom_call.1} parent=11 // pred_region
          %308 = vsyncadd [#allocation8], 0
          %s309 = sshll.u32 %s2, 4
          %s310 = int_to_ptr.hbm [resolvable:$true] %s309
          %s311 = sshll.u32 [#allocation9], 4
          %s312 = int_to_ptr.vmem [resolvable:$true] %s311
          %317 = dma.hbm_to_vmem [thread:$0]  %s310, 1024, %s312, [#allocation8], 64, 64, 4
        $region16: #{tpu_custom_call.1} parent=11 // pred_fallthru
          _
        // Predicated region
        $region17: #{tpu_custom_call.1} parent=11 // pred_check
          %p318 = pneg %p135
        $region18: #{tpu_custom_call.1} parent=11 // pred_check_branch
          %320 = sbr.rel (%p318) target = $region20
        $region19: #{tpu_custom_call.1} parent=11 // pred_region
          %322 = vsyncadd [#allocation11], 0
          %s323 = sshll.u32 %s3, 4
          %s324 = int_to_ptr.hbm [resolvable:$true] %s323
          %s325 = sshll.u32 [#allocation10], 4
          %s326 = int_to_ptr.vmem [resolvable:$true] %s325
          %331 = dma.hbm_to_vmem [thread:$0]  %s324, 1024, %s326, [#allocation11], 64, 64, 4
        $region20: #{tpu_custom_call.1} parent=11 // pred_fallthru
          _
        // Predicated region
        $region21: #{tpu_custom_call.1} parent=11 // pred_check
          %p332 = pneg %p156
        $region22: #{tpu_custom_call.1} parent=11 // pred_check_branch
          %334 = sbr.rel (%p332) target = $region24
        $region23: #{tpu_custom_call.1} parent=11 // pred_region
          %336 = vsyncadd [#allocation11], 0
          %s337 = sshll.u32 %s4, 4
          %s338 = int_to_ptr.hbm [resolvable:$true] %s337
          %s339 = sshll.u32 [#allocation12], 4
          %s340 = int_to_ptr.vmem [resolvable:$true] %s339
          %345 = dma.hbm_to_vmem [thread:$0]  %s338, 1024, %s340, [#allocation11], 64, 64, 4
        $region24: #{tpu_custom_call.1} parent=11 // pred_fallthru
          _
        // Predicated region
        $region25: #{tpu_custom_call.1} parent=11 // pred_check
          %p346 = pneg %p177
        $region26: #{tpu_custom_call.1} parent=11 // pred_check_branch
          %348 = sbr.rel (%p346) target = $region28
        $region27: #{tpu_custom_call.1} parent=11 // pred_region
          %350 = vsyncadd [#allocation14], 0
          %s351 = sshll.u32 %s5, 4
          %s352 = int_to_ptr.hbm [resolvable:$true] %s351
          %s353 = sshll.u32 [#allocation13], 4
          %s354 = int_to_ptr.vmem [resolvable:$true] %s353
          %359 = dma.hbm_to_vmem [thread:$0]  %s352, 1024, %s354, [#allocation14], 64, 64, 4
        $region28: #{tpu_custom_call.1} parent=11 // pred_fallthru
          _
        // Predicated region
        $region29: #{tpu_custom_call.1} parent=11 // pred_check
          %p360 = pneg %p198
        $region30: #{tpu_custom_call.1} parent=11 // pred_check_branch
          %362 = sbr.rel (%p360) target = $region32
        $region31: #{tpu_custom_call.1} parent=11 // pred_region
          _
        $region32: #{tpu_custom_call.1} parent=11 // pred_fallthru
          _
        // Predicated region
        $region33: #{tpu_custom_call.1} parent=11 // pred_check
          %p363 = pneg %p219
        $region34: #{tpu_custom_call.1} parent=11 // pred_check_branch
          %365 = sbr.rel (%p363) target = $region36
        $region35: #{tpu_custom_call.1} parent=11 // pred_region
          _
        $region36: #{tpu_custom_call.1} parent=11 // pred_fallthru
          _
        // Predicated region
        $region37: #{tpu_custom_call.1} parent=11 // pred_check
          %p366 = pneg %p240
        $region38: #{tpu_custom_call.1} parent=11 // pred_check_branch
          %368 = sbr.rel (%p366) target = $region40
        $region39: #{tpu_custom_call.1} parent=11 // pred_region
          _
        $region40: #{tpu_custom_call.1} parent=11 // pred_fallthru
          _
        // Predicated region
        $region41: #{tpu_custom_call.1} parent=11 // pred_check
          %p369 = pneg %p261
        $region42: #{tpu_custom_call.1} parent=11 // pred_check_branch
          %371 = sbr.rel (%p369) target = $region44
        $region43: #{tpu_custom_call.1} parent=11 // pred_region
          _
        $region44: #{tpu_custom_call.1} parent=11 // pred_fallthru
          _
      $region12: #{tpu_custom_call.1} parent=5 // pred_fallthru
        _
      %p372 = scmp.lt.s32.totalorder %s27, 2
      // Predicated region
      $region45: #{tpu_custom_call.1} parent=5 // pred_check
        %p373 = pneg %p372
      $region46: #{tpu_custom_call.1} parent=5 // pred_check_branch
        %375 = sbr.rel (%p373) target = $region48
      $region47: #{tpu_custom_call.1} parent=5 // pred_region
        // Predicated region
        $region49: #{tpu_custom_call.1} parent=47 // pred_check
          %p376 = pneg %p61
        $region50: #{tpu_custom_call.1} parent=47 // pred_check_branch
          %378 = sbr.rel (%p376) target = $region52
        $region51: #{tpu_custom_call.1} parent=47 // pred_region
          %s379 = sand.u32 %s51, 1
          %s380 = scalar_lea.sflag [#allocation5], %s379
          %s381 = sand.u32 %s51, 1
          %s382 = smul.addr %s381, 8
          %s383 = scalar_lea.vmem [#allocation4], %s382
          %s384 = smul.u32 2, %s35
          %386 = vsyncadd %s380, 0
          %s387 = smul.addr %s34, 2
          %s388 = sadd.s32 %s384, %s387
          %s389 = smul.addr %s388, 4
          %s390 = scalar_lea.hbm %s0, %s389
          %s391 = sshll.u32 %s390, 4
          %s392 = int_to_ptr.hbm [resolvable:$true] %s391
          %s393 = sshll.u32 %s383, 4
          %s394 = int_to_ptr.vmem [resolvable:$true] %s393
          %399 = dma.hbm_to_vmem [thread:$0]  %s392, 128, %s394, %s380, 64, 64, 4
        $region52: #{tpu_custom_call.1} parent=47 // pred_fallthru
          _
        // Predicated region
        $region53: #{tpu_custom_call.1} parent=47 // pred_check
          %p400 = pneg %p87
        $region54: #{tpu_custom_call.1} parent=47 // pred_check_branch
          %402 = sbr.rel (%p400) target = $region56
        $region55: #{tpu_custom_call.1} parent=47 // pred_region
          %s403 = sand.u32 %s27, 1
          %s404 = scalar_lea.sflag [#allocation8], %s403
          %s405 = sand.u32 %s77, 1
          %s406 = smul.addr %s405, 64
          %s407 = scalar_lea.vmem [#allocation7], %s406
          %409 = vsyncadd %s404, 0
          %s410 = smul.addr %s34, 16
          %s411 = smul.addr %s410, 4
          %s412 = scalar_lea.hbm %s1, %s411
          %s413 = sshll.u32 %s412, 4
          %s414 = int_to_ptr.hbm [resolvable:$true] %s413
          %s415 = sshll.u32 %s407, 4
          %s416 = int_to_ptr.vmem [resolvable:$true] %s415
          %421 = dma.hbm_to_vmem [thread:$0]  %s414, 1024, %s416, %s404, 64, 64, 4
        $region56: #{tpu_custom_call.1} parent=47 // pred_fallthru
          _
      $region48: #{tpu_custom_call.1} parent=5 // pred_fallthru
        _
      %p422 = scmp.le.s32.totalorder 1, %s27
      %p423 = scmp.lt.s32.totalorder %s27, 3
      %p424 = pnand %p422, %p423
      %p425 = pneg %p424
      // Predicated region
      $region57: #{tpu_custom_call.1} parent=5 // pred_check
        _
      $region58: #{tpu_custom_call.1} parent=5 // pred_check_branch
        %427 = sbr.rel (%p424) target = $region60
      $region59: #{tpu_custom_call.1} parent=5 // pred_region
        %s428 = ssub.s32 %s27, 1
        %s429 = sand.u32 %s54, 1
        %s430 = scalar_lea.sflag [#allocation5], %s429
        %s431 = sand.u32 %s54, 1
        %s432 = smul.addr %s431, 8
        %s433 = scalar_lea.vmem [#allocation4], %s432
        // Predicated region
        $region61: #{tpu_custom_call.1} parent=59 // pred_check
          %p434 = pneg %p67
        $region62: #{tpu_custom_call.1} parent=59 // pred_check_branch
          %436 = sbr.rel (%p434) target = $region64
        $region63: #{tpu_custom_call.1} parent=59 // pred_region
          %438 = dma.done %s430, 128
        $region64: #{tpu_custom_call.1} parent=59 // pred_fallthru
          _
        %s439 = sand.u32 %s32, 1
        %s440 = scalar_lea.sflag [#allocation8], %s439
        %s441 = sand.u32 %s80, 1
        %s442 = smul.addr %s441, 64
        %s443 = scalar_lea.vmem [#allocation7], %s442
        // Predicated region
        $region65: #{tpu_custom_call.1} parent=59 // pred_check
          %p444 = pneg %p93
        $region66: #{tpu_custom_call.1} parent=59 // pred_check_branch
          %446 = sbr.rel (%p444) target = $region68
        $region67: #{tpu_custom_call.1} parent=59 // pred_region
          %448 = dma.done %s440, 1024
        $region68: #{tpu_custom_call.1} parent=59 // pred_fallthru
          _
        // Predicated region
        $region69: #{tpu_custom_call.1} parent=59 // pred_check
          %p449 = pneg %p114
        $region70: #{tpu_custom_call.1} parent=59 // pred_check_branch
          %451 = sbr.rel (%p449) target = $region72
        $region71: #{tpu_custom_call.1} parent=59 // pred_region
          %453 = dma.done [#allocation8], 1024
        $region72: #{tpu_custom_call.1} parent=59 // pred_fallthru
          _
        // Predicated region
        $region73: #{tpu_custom_call.1} parent=59 // pred_check
          %p454 = pneg %p135
        $region74: #{tpu_custom_call.1} parent=59 // pred_check_branch
          %456 = sbr.rel (%p454) target = $region76
        $region75: #{tpu_custom_call.1} parent=59 // pred_region
          %458 = dma.done [#allocation11], 1024
        $region76: #{tpu_custom_call.1} parent=59 // pred_fallthru
          _
        // Predicated region
        $region77: #{tpu_custom_call.1} parent=59 // pred_check
          %p459 = pneg %p156
        $region78: #{tpu_custom_call.1} parent=59 // pred_check_branch
          %461 = sbr.rel (%p459) target = $region80
        $region79: #{tpu_custom_call.1} parent=59 // pred_region
          %463 = dma.done [#allocation11], 1024
        $region80: #{tpu_custom_call.1} parent=59 // pred_fallthru
          _
        // Predicated region
        $region81: #{tpu_custom_call.1} parent=59 // pred_check
          %p464 = pneg %p177
        $region82: #{tpu_custom_call.1} parent=59 // pred_check_branch
          %466 = sbr.rel (%p464) target = $region84
        $region83: #{tpu_custom_call.1} parent=59 // pred_region
          %468 = dma.done [#allocation14], 1024
        $region84: #{tpu_custom_call.1} parent=59 // pred_fallthru
          _
        %s469 = sand.u32 %s54, 1
        %s470 = scalar_lea.sflag [#allocation5], %s469
        %s471 = sand.u32 %s54, 1
        %s472 = smul.addr %s471, 8
        %s473 = scalar_lea.vmem [#allocation4], %s472
        %p474 = pneg %p67
        %p475 = pneg %p64
        %s476 = sand.u32 %s32, 1
        %s477 = scalar_lea.sflag [#allocation8], %s476
        %s478 = sand.u32 %s80, 1
        %s479 = smul.addr %s478, 64
        %s480 = scalar_lea.vmem [#allocation7], %s479
        %p481 = pneg %p93
        %p482 = pneg %p90
        %p483 = pneg %p114
        %p484 = pneg %p111
        %p485 = pneg %p135
        %p486 = pneg %p132
        %p487 = pneg %p156
        %p488 = pneg %p153
        %p489 = pneg %p177
        %p490 = pneg %p174
        %p491 = pneg %p198
        %p492 = pneg %p195
        %p493 = pneg %p219
        %p494 = pneg %p216
        %p495 = pneg %p240
        %p496 = pneg %p237
        %p497 = pneg %p261
        %p498 = pneg %p258
        %p499 = pneg %p289
        %p500 = pneg %p286
        %s501 = sand.u32 %s276, 1
        %s502 = scalar_lea.sflag [#allocation6], %s501
        %s503 = sand.u32 %s276, 1
        %s504 = smul.addr %s503, 16
        %s505 = scalar_lea.vmem [#allocation15], %s504
        %s506 = smul.u32 2, %s37
        %s507 = smul.u32 2, %s37
        %p508 = scmp.eq.s32.totalorder %s37, 0
        // Predicated region
        $region85: #{tpu_custom_call.1} parent=59 // pred_check
          %p509 = pneg %p508
        $region86: #{tpu_custom_call.1} parent=59 // pred_check_branch
          %511 = sbr.rel (%p509) target = $region88
        $region87: #{tpu_custom_call.1} parent=59 // pred_region
          %v512 = vld [vmem:[%s443] sm:$0xf]
          %v513 = vld [vmem:[%s443 + $0x4] sm:$0xf]
          %v514 = vld [vmem:[%s443 + $0x8] sm:$0xf]
          %v515 = vld [vmem:[%s443 + $0xc] sm:$0xf]
          %v516 = vld [vmem:[%s443 + $0x10] sm:$0xf]
          %v517 = vld [vmem:[%s443 + $0x14] sm:$0xf]
          %v518 = vld [vmem:[%s443 + $0x18] sm:$0xf]
          %v519 = vld [vmem:[%s443 + $0x1c] sm:$0xf]
          %v520 = vld [vmem:[%s443 + $0x20] sm:$0xf]
          %v521 = vld [vmem:[%s443 + $0x24] sm:$0xf]
          %v522 = vld [vmem:[%s443 + $0x28] sm:$0xf]
          %v523 = vld [vmem:[%s443 + $0x2c] sm:$0xf]
          %v524 = vld [vmem:[%s443 + $0x30] sm:$0xf]
          %v525 = vld [vmem:[%s443 + $0x34] sm:$0xf]
          %v526 = vld [vmem:[%s443 + $0x38] sm:$0xf]
          %v527 = vld [vmem:[%s443 + $0x3c] sm:$0xf]
          %v528 = vld [vmem:[#allocation10] sm:$0xf]
          %v529 = vld [vmem:[#allocation10 + $0x4] sm:$0xf]
          %v530 = vld [vmem:[#allocation10 + $0x8] sm:$0xf]
          %v531 = vld [vmem:[#allocation10 + $0xc] sm:$0xf]
          %v532 = vld [vmem:[#allocation10 + $0x10] sm:$0xf]
          %v533 = vld [vmem:[#allocation10 + $0x14] sm:$0xf]
          %v534 = vld [vmem:[#allocation10 + $0x18] sm:$0xf]
          %v535 = vld [vmem:[#allocation10 + $0x1c] sm:$0xf]
          %v536 = vld [vmem:[#allocation10 + $0x20] sm:$0xf]
          %v537 = vld [vmem:[#allocation10 + $0x24] sm:$0xf]
          %v538 = vld [vmem:[#allocation10 + $0x28] sm:$0xf]
          %v539 = vld [vmem:[#allocation10 + $0x2c] sm:$0xf]
          %v540 = vld [vmem:[#allocation10 + $0x30] sm:$0xf]
          %v541 = vld [vmem:[#allocation10 + $0x34] sm:$0xf]
          %v542 = vld [vmem:[#allocation10 + $0x38] sm:$0xf]
          %v543 = vld [vmem:[#allocation10 + $0x3c] sm:$0xf]
          %v544 = vld [vmem:[%s7] sm:$0x1]
          %v546 = vperm.slane %v544, 0
          %v564 = vunpack.c.l.b16 %v512
          %v565 = vunpack.c.l.b16 %v513
          %v566 = vunpack.c.l.b16 %v514
          %v567 = vunpack.c.l.b16 %v515
          %v568 = vunpack.c.l.b16 %v516
          %v569 = vunpack.c.l.b16 %v517
          %v570 = vunpack.c.l.b16 %v518
          %v571 = vunpack.c.l.b16 %v519
          %v572 = vunpack.c.l.b16 %v520
          %v573 = vunpack.c.l.b16 %v521
          %v574 = vunpack.c.l.b16 %v522
          %v575 = vunpack.c.l.b16 %v523
          %v576 = vunpack.c.l.b16 %v524
          %v577 = vunpack.c.l.b16 %v525
          %v578 = vunpack.c.l.b16 %v526
          %v579 = vunpack.c.l.b16 %v527
          %v580 = vpack.c.b16 %v565, %v564
          %v581 = vpack.c.b16 %v567, %v566
          %v582 = vpack.c.b16 %v569, %v568
          %v583 = vpack.c.b16 %v571, %v570
          %v584 = vpack.c.b16 %v573, %v572
          %v585 = vpack.c.b16 %v575, %v574
          %v586 = vpack.c.b16 %v577, %v576
          %v587 = vpack.c.b16 %v579, %v578
          %v612 = vunpack.c.l.b16 %v528
          %v613 = vunpack.c.l.b16 %v529
          %v614 = vunpack.c.l.b16 %v530
          %v615 = vunpack.c.l.b16 %v531
          %v616 = vunpack.c.l.b16 %v532
          %v617 = vunpack.c.l.b16 %v533
          %v618 = vunpack.c.l.b16 %v534
          %v619 = vunpack.c.l.b16 %v535
          %v620 = vunpack.c.l.b16 %v536
          %v621 = vunpack.c.l.b16 %v537
          %v622 = vunpack.c.l.b16 %v538
          %v623 = vunpack.c.l.b16 %v539
          %v624 = vunpack.c.l.b16 %v540
          %v625 = vunpack.c.l.b16 %v541
          %v626 = vunpack.c.l.b16 %v542
          %v627 = vunpack.c.l.b16 %v543
          %v628 = vpack.c.b16 %v613, %v612
          %v629 = vpack.c.b16 %v615, %v614
          %v630 = vpack.c.b16 %v617, %v616
          %v631 = vpack.c.b16 %v619, %v618
          %v632 = vpack.c.b16 %v621, %v620
          %v633 = vpack.c.b16 %v623, %v622
          %v634 = vpack.c.b16 %v625, %v624
          %v635 = vpack.c.b16 %v627, %v626
          %644 = vmatpush.bf16.msra.mxu0 %v635
          %645 = vmatpush.bf16.msra.mxu0 %v634
          %646 = vmatpush.bf16.msra.mxu0 %v633
          %647 = vmatpush.bf16.msra.mxu0 %v632
          %648 = vmatpush.bf16.msra.mxu0 %v631
          %649 = vmatpush.bf16.msra.mxu0 %v630
          %650 = vmatpush.bf16.msra.mxu0 %v629
          %651 = vmatpush.bf16.msra.mxu0 %v628
          %652 = vmatmul.bf16.gmra.mxu0 %v580
          %v653 = vpop.f32.mrf.mxu0
          %v654 = vadd.f32 %v546, %v653
          %v655 = vpop.f32.mrf.mxu0
          %v656 = vadd.f32 %v546, %v655
          %657 = vmatmul.bf16.gmra.mxu0 %v581
          %v658 = vpop.f32.mrf.mxu0
          %v659 = vadd.f32 %v546, %v658
          %v660 = vpop.f32.mrf.mxu0
          %v661 = vadd.f32 %v546, %v660
          %662 = vmatmul.bf16.gmra.mxu0 %v582
          %v663 = vpop.f32.mrf.mxu0
          %v664 = vadd.f32 %v546, %v663
          %v665 = vpop.f32.mrf.mxu0
          %v666 = vadd.f32 %v546, %v665
          %667 = vmatmul.bf16.gmra.mxu0 %v583
          %v668 = vpop.f32.mrf.mxu0
          %v669 = vadd.f32 %v546, %v668
          %v670 = vpop.f32.mrf.mxu0
          %v671 = vadd.f32 %v546, %v670
          %672 = vmatmul.bf16.gmra.mxu0 %v584
          %v673 = vpop.f32.mrf.mxu0
          %v674 = vadd.f32 %v546, %v673
          %v675 = vpop.f32.mrf.mxu0
          %v676 = vadd.f32 %v546, %v675
          %677 = vmatmul.bf16.gmra.mxu0 %v585
          %v678 = vpop.f32.mrf.mxu0
          %v679 = vadd.f32 %v546, %v678
          %v680 = vpop.f32.mrf.mxu0
          %v681 = vadd.f32 %v546, %v680
          %682 = vmatmul.bf16.gmra.mxu0 %v586
          %v683 = vpop.f32.mrf.mxu0
          %v684 = vadd.f32 %v546, %v683
          %v685 = vpop.f32.mrf.mxu0
          %v686 = vadd.f32 %v546, %v685
          %687 = vmatmul.bf16.gmra.mxu0 %v587
          %v688 = vpop.f32.mrf.mxu0
          %v689 = vadd.f32 %v546, %v688
          %v690 = vpop.f32.mrf.mxu0
          %v691 = vadd.f32 %v546, %v690
          %692 = vdwg.mxu0
          %v693 = vld [vmem:[#allocation12] sm:$0xf]
          %v694 = vld [vmem:[#allocation12 + $0x4] sm:$0xf]
          %v695 = vld [vmem:[#allocation12 + $0x8] sm:$0xf]
          %v696 = vld [vmem:[#allocation12 + $0xc] sm:$0xf]
          %v697 = vld [vmem:[#allocation12 + $0x10] sm:$0xf]
          %v698 = vld [vmem:[#allocation12 + $0x14] sm:$0xf]
          %v699 = vld [vmem:[#allocation12 + $0x18] sm:$0xf]
          %v700 = vld [vmem:[#allocation12 + $0x1c] sm:$0xf]
          %v701 = vld [vmem:[#allocation12 + $0x20] sm:$0xf]
          %v702 = vld [vmem:[#allocation12 + $0x24] sm:$0xf]
          %v703 = vld [vmem:[#allocation12 + $0x28] sm:$0xf]
          %v704 = vld [vmem:[#allocation12 + $0x2c] sm:$0xf]
          %v705 = vld [vmem:[#allocation12 + $0x30] sm:$0xf]
          %v706 = vld [vmem:[#allocation12 + $0x34] sm:$0xf]
          %v707 = vld [vmem:[#allocation12 + $0x38] sm:$0xf]
          %v708 = vld [vmem:[#allocation12 + $0x3c] sm:$0xf]
          %v709 = vld [vmem:[%s8] sm:$0x1]
          %v711 = vperm.slane %v709, 0
          %v729 = vunpack.c.l.b16 %v693
          %v730 = vunpack.c.l.b16 %v694
          %v731 = vunpack.c.l.b16 %v695
          %v732 = vunpack.c.l.b16 %v696
          %v733 = vunpack.c.l.b16 %v697
          %v734 = vunpack.c.l.b16 %v698
          %v735 = vunpack.c.l.b16 %v699
          %v736 = vunpack.c.l.b16 %v700
          %v737 = vunpack.c.l.b16 %v701
          %v738 = vunpack.c.l.b16 %v702
          %v739 = vunpack.c.l.b16 %v703
          %v740 = vunpack.c.l.b16 %v704
          %v741 = vunpack.c.l.b16 %v705
          %v742 = vunpack.c.l.b16 %v706
          %v743 = vunpack.c.l.b16 %v707
          %v744 = vunpack.c.l.b16 %v708
          %v745 = vpack.c.b16 %v730, %v729
          %v746 = vpack.c.b16 %v732, %v731
          %v747 = vpack.c.b16 %v734, %v733
          %v748 = vpack.c.b16 %v736, %v735
          %v749 = vpack.c.b16 %v738, %v737
          %v750 = vpack.c.b16 %v740, %v739
          %v751 = vpack.c.b16 %v742, %v741
          %v752 = vpack.c.b16 %v744, %v743
          %761 = vmatpush.bf16.msra.mxu0 %v752
          %762 = vmatpush.bf16.msra.mxu0 %v751
          %763 = vmatpush.bf16.msra.mxu0 %v750
          %764 = vmatpush.bf16.msra.mxu0 %v749
          %765 = vmatpush.bf16.msra.mxu0 %v748
          %766 = vmatpush.bf16.msra.mxu0 %v747
          %767 = vmatpush.bf16.msra.mxu0 %v746
          %768 = vmatpush.bf16.msra.mxu0 %v745
          %769 = vmatmul.bf16.gmra.mxu0 %v580
          %v770 = vpop.f32.mrf.mxu0
          %v771 = vadd.f32 %v711, %v770
          %v772 = vpop.f32.mrf.mxu0
          %v773 = vadd.f32 %v711, %v772
          %774 = vmatmul.bf16.gmra.mxu0 %v581
          %v775 = vpop.f32.mrf.mxu0
          %v776 = vadd.f32 %v711, %v775
          %v777 = vpop.f32.mrf.mxu0
          %v778 = vadd.f32 %v711, %v777
          %779 = vmatmul.bf16.gmra.mxu0 %v582
          %v780 = vpop.f32.mrf.mxu0
          %v781 = vadd.f32 %v711, %v780
          %v782 = vpop.f32.mrf.mxu0
          %v783 = vadd.f32 %v711, %v782
          %784 = vmatmul.bf16.gmra.mxu0 %v583
          %v785 = vpop.f32.mrf.mxu0
          %v786 = vadd.f32 %v711, %v785
          %v787 = vpop.f32.mrf.mxu0
          %v788 = vadd.f32 %v711, %v787
          %789 = vmatmul.bf16.gmra.mxu0 %v584
          %v790 = vpop.f32.mrf.mxu0
          %v791 = vadd.f32 %v711, %v790
          %v792 = vpop.f32.mrf.mxu0
          %v793 = vadd.f32 %v711, %v792
          %794 = vmatmul.bf16.gmra.mxu0 %v585
          %v795 = vpop.f32.mrf.mxu0
          %v796 = vadd.f32 %v711, %v795
          %v797 = vpop.f32.mrf.mxu0
          %v798 = vadd.f32 %v711, %v797
          %799 = vmatmul.bf16.gmra.mxu0 %v586
          %v800 = vpop.f32.mrf.mxu0
          %v801 = vadd.f32 %v711, %v800
          %v802 = vpop.f32.mrf.mxu0
          %v803 = vadd.f32 %v711, %v802
          %804 = vmatmul.bf16.gmra.mxu0 %v587
          %v805 = vpop.f32.mrf.mxu0
          %v806 = vadd.f32 %v711, %v805
          %v807 = vpop.f32.mrf.mxu0
          %v808 = vadd.f32 %v711, %v807
          %809 = vdwg.mxu0
          %810 = vxpose.xlu0.b32.start [1/16] %v654, 128
          %811 = vxpose.xlu0.b32.cont [2/16] %v656, 128
          %812 = vxpose.xlu0.b32.cont [3/16] %v659, 128
          %813 = vxpose.xlu0.b32.cont [4/16] %v661, 128
          %814 = vxpose.xlu0.b32.cont [5/16] %v664, 128
          %815 = vxpose.xlu0.b32.cont [6/16] %v666, 128
          %816 = vxpose.xlu0.b32.cont [7/16] %v669, 128
          %817 = vxpose.xlu0.b32.cont [8/16] %v671, 128
          %818 = vxpose.xlu0.b32.cont [9/16] %v674, 128
          %819 = vxpose.xlu0.b32.cont [10/16] %v676, 128
          %820 = vxpose.xlu0.b32.cont [11/16] %v679, 128
          %821 = vxpose.xlu0.b32.cont [12/16] %v681, 128
          %822 = vxpose.xlu0.b32.cont [13/16] %v684, 128
          %823 = vxpose.xlu0.b32.cont [14/16] %v686, 128
          %824 = vxpose.xlu0.b32.cont [15/16] %v689, 128
          %825 = vxpose.xlu0.b32.end [16/16] %v691, 128
          %v826 = vpop.trf.xlu0
          %v827 = vpop.trf.xlu0
          %v828 = vpop.trf.xlu0
          %v829 = vpop.trf.xlu0
          %v830 = vpop.trf.xlu0
          %v831 = vpop.trf.xlu0
          %v832 = vpop.trf.xlu0
          %v833 = vpop.trf.xlu0
          %v834 = vpop.trf.xlu0
          %v835 = vpop.trf.xlu0
          %v836 = vpop.trf.xlu0
          %v837 = vpop.trf.xlu0
          %v838 = vpop.trf.xlu0
          %v839 = vpop.trf.xlu0
          %v840 = vpop.trf.xlu0
          %v841 = vpop.trf.xlu0
          %v842 = vpack.c.bf16 %v826, %v826
          %v843 = vpack.c.bf16 %v827, %v827
          %v844 = vpack.c.bf16 %v828, %v828
          %v845 = vpack.c.bf16 %v829, %v829
          %v846 = vpack.c.bf16 %v830, %v830
          %v847 = vpack.c.bf16 %v831, %v831
          %v848 = vpack.c.bf16 %v832, %v832
          %v849 = vpack.c.bf16 %v833, %v833
          %v850 = vpack.c.bf16 %v834, %v834
          %v851 = vpack.c.bf16 %v835, %v835
          %v852 = vpack.c.bf16 %v836, %v836
          %v853 = vpack.c.bf16 %v837, %v837
          %v854 = vpack.c.bf16 %v838, %v838
          %v855 = vpack.c.bf16 %v839, %v839
          %v856 = vpack.c.bf16 %v840, %v840
          %v857 = vpack.c.bf16 %v841, %v841
          %858 = vst [vmem:[#allocation2] sm:$0xf] %v842
          %859 = vst [vmem:[#allocation2 + $0x4] sm:$0xf] %v843
          %860 = vst [vmem:[#allocation2 + $0x8] sm:$0xf] %v844
          %861 = vst [vmem:[#allocation2 + $0xc] sm:$0xf] %v845
          %862 = vst [vmem:[#allocation2 + $0x10] sm:$0xf] %v846
          %863 = vst [vmem:[#allocation2 + $0x14] sm:$0xf] %v847
          %864 = vst [vmem:[#allocation2 + $0x18] sm:$0xf] %v848
          %865 = vst [vmem:[#allocation2 + $0x1c] sm:$0xf] %v849
          %866 = vst [vmem:[#allocation2 + $0x20] sm:$0xf] %v850
          %867 = vst [vmem:[#allocation2 + $0x24] sm:$0xf] %v851
          %868 = vst [vmem:[#allocation2 + $0x28] sm:$0xf] %v852
          %869 = vst [vmem:[#allocation2 + $0x2c] sm:$0xf] %v853
          %870 = vst [vmem:[#allocation2 + $0x30] sm:$0xf] %v854
          %871 = vst [vmem:[#allocation2 + $0x34] sm:$0xf] %v855
          %872 = vst [vmem:[#allocation2 + $0x38] sm:$0xf] %v856
          %873 = vst [vmem:[#allocation2 + $0x3c] sm:$0xf] %v857
          %v874 = vpack.c.bf16 %v771, %v771
          %v875 = vpack.c.bf16 %v773, %v773
          %v876 = vpack.c.bf16 %v776, %v776
          %v877 = vpack.c.bf16 %v778, %v778
          %v878 = vpack.c.bf16 %v781, %v781
          %v879 = vpack.c.bf16 %v783, %v783
          %v880 = vpack.c.bf16 %v786, %v786
          %v881 = vpack.c.bf16 %v788, %v788
          %v882 = vpack.c.bf16 %v791, %v791
          %v883 = vpack.c.bf16 %v793, %v793
          %v884 = vpack.c.bf16 %v796, %v796
          %v885 = vpack.c.bf16 %v798, %v798
          %v886 = vpack.c.bf16 %v801, %v801
          %v887 = vpack.c.bf16 %v803, %v803
          %v888 = vpack.c.bf16 %v806, %v806
          %v889 = vpack.c.bf16 %v808, %v808
          %890 = vst [vmem:[#allocation3] sm:$0xf] %v874
          %891 = vst [vmem:[#allocation3 + $0x4] sm:$0xf] %v875
          %892 = vst [vmem:[#allocation3 + $0x8] sm:$0xf] %v876
          %893 = vst [vmem:[#allocation3 + $0xc] sm:$0xf] %v877
          %894 = vst [vmem:[#allocation3 + $0x10] sm:$0xf] %v878
          %895 = vst [vmem:[#allocation3 + $0x14] sm:$0xf] %v879
          %896 = vst [vmem:[#allocation3 + $0x18] sm:$0xf] %v880
          %897 = vst [vmem:[#allocation3 + $0x1c] sm:$0xf] %v881
          %898 = vst [vmem:[#allocation3 + $0x20] sm:$0xf] %v882
          %899 = vst [vmem:[#allocation3 + $0x24] sm:$0xf] %v883
          %900 = vst [vmem:[#allocation3 + $0x28] sm:$0xf] %v884
          %901 = vst [vmem:[#allocation3 + $0x2c] sm:$0xf] %v885
          %902 = vst [vmem:[#allocation3 + $0x30] sm:$0xf] %v886
          %903 = vst [vmem:[#allocation3 + $0x34] sm:$0xf] %v887
          %904 = vst [vmem:[#allocation3 + $0x38] sm:$0xf] %v888
          %905 = vst [vmem:[#allocation3 + $0x3c] sm:$0xf] %v889
        $region88: #{tpu_custom_call.1} parent=59 // pred_fallthru
          _
        %v906 = vld [vmem:[%s433] sm:$0xf]
        %v907 = vld [vmem:[%s433 + $0x4] sm:$0xf]
        %v908 = vld [vmem:[#allocation9] sm:$0xf]
        %v909 = vld [vmem:[#allocation9 + $0x4] sm:$0xf]
        %v910 = vld [vmem:[#allocation9 + $0x8] sm:$0xf]
        %v911 = vld [vmem:[#allocation9 + $0xc] sm:$0xf]
        %v912 = vld [vmem:[#allocation9 + $0x10] sm:$0xf]
        %v913 = vld [vmem:[#allocation9 + $0x14] sm:$0xf]
        %v914 = vld [vmem:[#allocation9 + $0x18] sm:$0xf]
        %v915 = vld [vmem:[#allocation9 + $0x1c] sm:$0xf]
        %v916 = vld [vmem:[#allocation9 + $0x20] sm:$0xf]
        %v917 = vld [vmem:[#allocation9 + $0x24] sm:$0xf]
        %v918 = vld [vmem:[#allocation9 + $0x28] sm:$0xf]
        %v919 = vld [vmem:[#allocation9 + $0x2c] sm:$0xf]
        %v920 = vld [vmem:[#allocation9 + $0x30] sm:$0xf]
        %v921 = vld [vmem:[#allocation9 + $0x34] sm:$0xf]
        %v922 = vld [vmem:[#allocation9 + $0x38] sm:$0xf]
        %v923 = vld [vmem:[#allocation9 + $0x3c] sm:$0xf]
        %v924 = vld [vmem:[%s6] sm:$0x1]
        %v926 = vperm.slane %v924, 0
        %v930 = vunpack.c.l.b16 %v906
        %v931 = vunpack.c.l.b16 %v907
        %v932 = vpack.c.b16 %v931, %v930
        %v950 = vunpack.c.l.b16 %v908
        %v951 = vunpack.c.l.b16 %v909
        %v952 = vunpack.c.l.b16 %v910
        %v953 = vunpack.c.l.b16 %v911
        %v954 = vunpack.c.l.b16 %v912
        %v955 = vunpack.c.l.b16 %v913
        %v956 = vunpack.c.l.b16 %v914
        %v957 = vunpack.c.l.b16 %v915
        %v958 = vunpack.c.l.b16 %v916
        %v959 = vunpack.c.l.b16 %v917
        %v960 = vunpack.c.l.b16 %v918
        %v961 = vunpack.c.l.b16 %v919
        %v962 = vunpack.c.l.b16 %v920
        %v963 = vunpack.c.l.b16 %v921
        %v964 = vunpack.c.l.b16 %v922
        %v965 = vunpack.c.l.b16 %v923
        %v966 = vpack.c.b16 %v951, %v950
        %v967 = vpack.c.b16 %v953, %v952
        %v968 = vpack.c.b16 %v955, %v954
        %v969 = vpack.c.b16 %v957, %v956
        %v970 = vpack.c.b16 %v959, %v958
        %v971 = vpack.c.b16 %v961, %v960
        %v972 = vpack.c.b16 %v963, %v962
        %v973 = vpack.c.b16 %v965, %v964
        %982 = vmatpush.bf16.msra.mxu0 %v973
        %983 = vmatpush.bf16.msra.mxu0 %v972
        %984 = vmatpush.bf16.msra.mxu0 %v971
        %985 = vmatpush.bf16.msra.mxu0 %v970
        %986 = vmatpush.bf16.msra.mxu0 %v969
        %987 = vmatpush.bf16.msra.mxu0 %v968
        %988 = vmatpush.bf16.msra.mxu0 %v967
        %989 = vmatpush.bf16.msra.mxu0 %v966
        %990 = vmatmul.bf16.gmra.mxu0 %v932
        %v991 = vpop.f32.mrf.mxu0
        %v992 = vadd.f32 %v926, %v991
        %v993 = vpop.f32.mrf.mxu0
        %v994 = vadd.f32 %v926, %v993
        %995 = vdwg.mxu0
        %v996 = vpack.c.bf16 %v994, %v992
        %v997 = vld [vmem:[#allocation2] sm:$0xf]
        %v998 = vld [vmem:[#allocation2 + $0x4] sm:$0xf]
        %v999 = vld [vmem:[#allocation2 + $0x8] sm:$0xf]
        %v1000 = vld [vmem:[#allocation2 + $0xc] sm:$0xf]
        %v1001 = vld [vmem:[#allocation2 + $0x10] sm:$0xf]
        %v1002 = vld [vmem:[#allocation2 + $0x14] sm:$0xf]
        %v1003 = vld [vmem:[#allocation2 + $0x18] sm:$0xf]
        %v1004 = vld [vmem:[#allocation2 + $0x1c] sm:$0xf]
        %v1005 = vld [vmem:[#allocation2 + $0x20] sm:$0xf]
        %v1006 = vld [vmem:[#allocation2 + $0x24] sm:$0xf]
        %v1007 = vld [vmem:[#allocation2 + $0x28] sm:$0xf]
        %v1008 = vld [vmem:[#allocation2 + $0x2c] sm:$0xf]
        %v1009 = vld [vmem:[#allocation2 + $0x30] sm:$0xf]
        %v1010 = vld [vmem:[#allocation2 + $0x34] sm:$0xf]
        %v1011 = vld [vmem:[#allocation2 + $0x38] sm:$0xf]
        %v1012 = vld [vmem:[#allocation2 + $0x3c] sm:$0xf]
        %v1029 = vunpack.c.l.b16 %v997
        %v1030 = vunpack.c.l.b16 %v998
        %v1031 = vunpack.c.l.b16 %v999
        %v1032 = vunpack.c.l.b16 %v1000
        %v1033 = vunpack.c.l.b16 %v1001
        %v1034 = vunpack.c.l.b16 %v1002
        %v1035 = vunpack.c.l.b16 %v1003
        %v1036 = vunpack.c.l.b16 %v1004
        %v1037 = vunpack.c.l.b16 %v1005
        %v1038 = vunpack.c.l.b16 %v1006
        %v1039 = vunpack.c.l.b16 %v1007
        %v1040 = vunpack.c.l.b16 %v1008
        %v1041 = vunpack.c.l.b16 %v1009
        %v1042 = vunpack.c.l.b16 %v1010
        %v1043 = vunpack.c.l.b16 %v1011
        %v1044 = vunpack.c.l.b16 %v1012
        %v1045 = vpack.c.b16 %v1030, %v1029
        %v1046 = vpack.c.b16 %v1032, %v1031
        %v1047 = vpack.c.b16 %v1034, %v1033
        %v1048 = vpack.c.b16 %v1036, %v1035
        %v1049 = vpack.c.b16 %v1038, %v1037
        %v1050 = vpack.c.b16 %v1040, %v1039
        %v1051 = vpack.c.b16 %v1042, %v1041
        %v1052 = vpack.c.b16 %v1044, %v1043
        %1061 = vmatpush.bf16.msra.mxu0 %v1052
        %1062 = vmatpush.bf16.msra.mxu0 %v1051
        %1063 = vmatpush.bf16.msra.mxu0 %v1050
        %1064 = vmatpush.bf16.msra.mxu0 %v1049
        %1065 = vmatpush.bf16.msra.mxu0 %v1048
        %1066 = vmatpush.bf16.msra.mxu0 %v1047
        %1067 = vmatpush.bf16.msra.mxu0 %v1046
        %1068 = vmatpush.bf16.msra.mxu0 %v1045
        %1069 = vmatmul.bf16.gmra.mxu0 %v996
        %v1070 = vpop.f32.mrf.mxu0
        %v1071 = vadd.f32 0.0, %v1070
        %v1072 = vpop.f32.mrf.mxu0
        %v1073 = vadd.f32 0.0, %v1072
        %1074 = vdwg.mxu0
        %v1075 = vmul.f32 %v1071, 0.088388346
        %v1076 = vmul.f32 %v1073, 0.088388346
        %v1077 = vlaneseq
        %v1078 = vand.u32 %v1077, 127
        %vm1079 = vcmp.lt.s32.totalorder %v1078, 10
        %v1080 = vsel %vm1079, %v1075, -1e+30
        %v1081 = vsel %vm1079, %v1076, -1e+30
        %1082 = vmax.xlane.f32.xlu0 %v1080
        %v1083 = vpop.xlane.xlu0 %1082
        %1084 = vmax.xlane.f32.xlu0 %v1081
        %v1085 = vpop.xlane.xlu0 %1084
        %v1086 = vsub.f32 %v1080, %v1083
        %v1087 = vsub.f32 %v1081, %v1085
        %v1088 = vmul.f32 %v1086, 1.442695
        %v1089 = vpow.pop %v1088
        %v1090 = vmul.f32 %v1087, 1.442695
        %v1091 = vpow.pop %v1090
        %1092 = vadd.xlane.f32.xlu0 %v1089
        %v1093 = vpop.xlane.xlu0 %1092
        %1094 = vadd.xlane.f32.xlu0 %v1091
        %v1095 = vpop.xlane.xlu0 %1094
        %v1096 = vrcp.pop %v1093
        %v1097 = vrcp.pop %v1095
        %v1098 = vmul.f32 %v1089, %v1096
        %v1099 = vmul.f32 %v1091, %v1097
        %v1100 = vpack.c.bf16 %v1099, %v1098
        %v1101 = vld [vmem:[#allocation3] sm:$0xf]
        %v1102 = vld [vmem:[#allocation3 + $0x4] sm:$0xf]
        %v1103 = vld [vmem:[#allocation3 + $0x8] sm:$0xf]
        %v1104 = vld [vmem:[#allocation3 + $0xc] sm:$0xf]
        %v1105 = vld [vmem:[#allocation3 + $0x10] sm:$0xf]
        %v1106 = vld [vmem:[#allocation3 + $0x14] sm:$0xf]
        %v1107 = vld [vmem:[#allocation3 + $0x18] sm:$0xf]
        %v1108 = vld [vmem:[#allocation3 + $0x1c] sm:$0xf]
        %v1109 = vld [vmem:[#allocation3 + $0x20] sm:$0xf]
        %v1110 = vld [vmem:[#allocation3 + $0x24] sm:$0xf]
        %v1111 = vld [vmem:[#allocation3 + $0x28] sm:$0xf]
        %v1112 = vld [vmem:[#allocation3 + $0x2c] sm:$0xf]
        %v1113 = vld [vmem:[#allocation3 + $0x30] sm:$0xf]
        %v1114 = vld [vmem:[#allocation3 + $0x34] sm:$0xf]
        %v1115 = vld [vmem:[#allocation3 + $0x38] sm:$0xf]
        %v1116 = vld [vmem:[#allocation3 + $0x3c] sm:$0xf]
        %v1133 = vunpack.c.l.b16 %v1101
        %v1134 = vunpack.c.l.b16 %v1102
        %v1135 = vunpack.c.l.b16 %v1103
        %v1136 = vunpack.c.l.b16 %v1104
        %v1137 = vunpack.c.l.b16 %v1105
        %v1138 = vunpack.c.l.b16 %v1106
        %v1139 = vunpack.c.l.b16 %v1107
        %v1140 = vunpack.c.l.b16 %v1108
        %v1141 = vunpack.c.l.b16 %v1109
        %v1142 = vunpack.c.l.b16 %v1110
        %v1143 = vunpack.c.l.b16 %v1111
        %v1144 = vunpack.c.l.b16 %v1112
        %v1145 = vunpack.c.l.b16 %v1113
        %v1146 = vunpack.c.l.b16 %v1114
        %v1147 = vunpack.c.l.b16 %v1115
        %v1148 = vunpack.c.l.b16 %v1116
        %v1149 = vpack.c.b16 %v1134, %v1133
        %v1150 = vpack.c.b16 %v1136, %v1135
        %v1151 = vpack.c.b16 %v1138, %v1137
        %v1152 = vpack.c.b16 %v1140, %v1139
        %v1153 = vpack.c.b16 %v1142, %v1141
        %v1154 = vpack.c.b16 %v1144, %v1143
        %v1155 = vpack.c.b16 %v1146, %v1145
        %v1156 = vpack.c.b16 %v1148, %v1147
        %1165 = vmatpush.bf16.msra.mxu0 %v1156
        %1166 = vmatpush.bf16.msra.mxu0 %v1155
        %1167 = vmatpush.bf16.msra.mxu0 %v1154
        %1168 = vmatpush.bf16.msra.mxu0 %v1153
        %1169 = vmatpush.bf16.msra.mxu0 %v1152
        %1170 = vmatpush.bf16.msra.mxu0 %v1151
        %1171 = vmatpush.bf16.msra.mxu0 %v1150
        %1172 = vmatpush.bf16.msra.mxu0 %v1149
        %1173 = vmatmul.bf16.gmra.mxu0 %v1100
        %v1174 = vpop.f32.mrf.mxu0
        %v1175 = vadd.f32 0.0, %v1174
        %v1176 = vpop.f32.mrf.mxu0
        %v1177 = vadd.f32 0.0, %v1176
        %1178 = vdwg.mxu0
        %v1179 = vpack.c.bf16 %v1177, %v1175
        %v1180 = vld [vmem:[#allocation13] sm:$0xf]
        %v1181 = vld [vmem:[#allocation13 + $0x4] sm:$0xf]
        %v1182 = vld [vmem:[#allocation13 + $0x8] sm:$0xf]
        %v1183 = vld [vmem:[#allocation13 + $0xc] sm:$0xf]
        %v1184 = vld [vmem:[#allocation13 + $0x10] sm:$0xf]
        %v1185 = vld [vmem:[#allocation13 + $0x14] sm:$0xf]
        %v1186 = vld [vmem:[#allocation13 + $0x18] sm:$0xf]
        %v1187 = vld [vmem:[#allocation13 + $0x1c] sm:$0xf]
        %v1188 = vld [vmem:[#allocation13 + $0x20] sm:$0xf]
        %v1189 = vld [vmem:[#allocation13 + $0x24] sm:$0xf]
        %v1190 = vld [vmem:[#allocation13 + $0x28] sm:$0xf]
        %v1191 = vld [vmem:[#allocation13 + $0x2c] sm:$0xf]
        %v1192 = vld [vmem:[#allocation13 + $0x30] sm:$0xf]
        %v1193 = vld [vmem:[#allocation13 + $0x34] sm:$0xf]
        %v1194 = vld [vmem:[#allocation13 + $0x38] sm:$0xf]
        %v1195 = vld [vmem:[#allocation13 + $0x3c] sm:$0xf]
        %v1196 = vld [vmem:[%s9] sm:$0x1]
        %v1198 = vperm.slane %v1196, 0
        %v1216 = vunpack.c.l.b16 %v1180
        %v1217 = vunpack.c.l.b16 %v1181
        %v1218 = vunpack.c.l.b16 %v1182
        %v1219 = vunpack.c.l.b16 %v1183
        %v1220 = vunpack.c.l.b16 %v1184
        %v1221 = vunpack.c.l.b16 %v1185
        %v1222 = vunpack.c.l.b16 %v1186
        %v1223 = vunpack.c.l.b16 %v1187
        %v1224 = vunpack.c.l.b16 %v1188
        %v1225 = vunpack.c.l.b16 %v1189
        %v1226 = vunpack.c.l.b16 %v1190
        %v1227 = vunpack.c.l.b16 %v1191
        %v1228 = vunpack.c.l.b16 %v1192
        %v1229 = vunpack.c.l.b16 %v1193
        %v1230 = vunpack.c.l.b16 %v1194
        %v1231 = vunpack.c.l.b16 %v1195
        %v1232 = vpack.c.b16 %v1217, %v1216
        %v1233 = vpack.c.b16 %v1219, %v1218
        %v1234 = vpack.c.b16 %v1221, %v1220
        %v1235 = vpack.c.b16 %v1223, %v1222
        %v1236 = vpack.c.b16 %v1225, %v1224
        %v1237 = vpack.c.b16 %v1227, %v1226
        %v1238 = vpack.c.b16 %v1229, %v1228
        %v1239 = vpack.c.b16 %v1231, %v1230
        %1248 = vmatpush.bf16.msra.mxu0 %v1239
        %1249 = vmatpush.bf16.msra.mxu0 %v1238
        %1250 = vmatpush.bf16.msra.mxu0 %v1237
        %1251 = vmatpush.bf16.msra.mxu0 %v1236
        %1252 = vmatpush.bf16.msra.mxu0 %v1235
        %1253 = vmatpush.bf16.msra.mxu0 %v1234
        %1254 = vmatpush.bf16.msra.mxu0 %v1233
        %1255 = vmatpush.bf16.msra.mxu0 %v1232
        %1256 = vmatmul.bf16.gmra.mxu0 %v1179
        %v1257 = vpop.f32.mrf.mxu0
        %v1258 = vadd.f32 %v1198, %v1257
        %v1259 = vpop.f32.mrf.mxu0
        %v1260 = vadd.f32 %v1198, %v1259
        %1261 = vdwg.mxu0
        %1262 = vst [vmem:[%s505] sm:$0xff] %v1258
        %1263 = vst [vmem:[%s505 + $0x8] sm:$0xff] %v1260
        %s1264 = sand.u32 %s276, 1
        %s1265 = scalar_lea.sflag [#allocation6], %s1264
        %s1266 = sand.u32 %s276, 1
        %s1267 = smul.addr %s1266, 16
        %s1268 = scalar_lea.vmem [#allocation15], %s1267
        // Predicated region
        $region89: #{tpu_custom_call.1} parent=59 // pred_check
          %p1269 = pneg %p286
        $region90: #{tpu_custom_call.1} parent=59 // pred_check_branch
          %1271 = sbr.rel (%p1269) target = $region92
        $region91: #{tpu_custom_call.1} parent=59 // pred_region
          %s1272 = smul.u32 2, %s37
          %1274 = vsyncadd %s1265, 0
          %s1275 = smul.addr %s36, 2
          %s1276 = sadd.s32 %s1272, %s1275
          %s1277 = smul.addr %s1276, 8
          %s1278 = scalar_lea.hbm %s10, %s1277
          %s1279 = sshll.u32 %s1268, 4
          %s1280 = int_to_ptr.vmem [resolvable:$true] %s1279
          %s1281 = sshll.u32 %s1278, 4
          %s1282 = int_to_ptr.hbm [resolvable:$true] %s1281
          %1287 = dma.vmem_to_hbm [thread:$0]  %s1280, 256, %s1282, %s1265, 128, 128, 8
        $region92: #{tpu_custom_call.1} parent=59 // pred_fallthru
          _
      $region60: #{tpu_custom_call.1} parent=5 // pred_fallthru
        _
      %p1288 = scmp.le.s32.totalorder 2, %s27
      // Predicated region
      $region93: #{tpu_custom_call.1} parent=5 // pred_check
        %p1289 = pneg %p1288
      $region94: #{tpu_custom_call.1} parent=5 // pred_check_branch
        %1291 = sbr.rel (%p1289) target = $region96
      $region95: #{tpu_custom_call.1} parent=5 // pred_region
        %s1292 = ssub.s32 %s27, 2
        // Predicated region
        $region97: #{tpu_custom_call.1} parent=95 // pred_check
          %p1293 = pneg %p292
        $region98: #{tpu_custom_call.1} parent=95 // pred_check_branch
          %1295 = sbr.rel (%p1293) target = $region100
        $region99: #{tpu_custom_call.1} parent=95 // pred_region
          %s1296 = sand.u32 %s277, 1
          %s1297 = scalar_lea.sflag [#allocation6], %s1296
          %s1298 = sand.u32 %s277, 1
          %s1299 = smul.addr %s1298, 16
          %s1300 = scalar_lea.vmem [#allocation15], %s1299
          %1302 = dma.done %s1297, 256
        $region100: #{tpu_custom_call.1} parent=95 // pred_fallthru
          _
      $region96: #{tpu_custom_call.1} parent=5 // pred_fallthru
        _
    $region6: #{tpu_custom_call.1} parent=1 // loop_footer
      %s31 = sadd.s32 1, %s27
    $region7: #{tpu_custom_call.1} parent=1 // loop_footer_branch
      %26 = sbr.rel target = $region3
    $region8: #{tpu_custom_call.1} parent=1 // loop_exit
      _
    %1303 = vsyncpa [#allocation5], 1
    %s1304 = scalar_lea.sflag [#allocation5], 1
    %1305 = vsyncpa %s1304, 1
    %1306 = vsyncpa [#allocation8], 1
    %s1307 = scalar_lea.sflag [#allocation8], 1
    %1308 = vsyncpa %s1307, 1
    %1309 = vsyncpa [#allocation11], 1
    %1310 = vsyncpa [#allocation14], 1
    %1311 = vsyncpa [#allocation6], 1
    %s1312 = scalar_lea.sflag [#allocation6], 1
    %1313 = vsyncpa %s1312, 1

// kernel: tpu_custom_call.1
$region0: #{tpu_custom_call.1}
  #allocation0 [shape = 'u32[]', space=smem, size = 0x4, offset = 0x4, fixed_abs, tag = 'smem constant byte address 0x4 - core index']
  #allocation1 [shape = 'u32[72,128]{1,0:T(1,128)}', space=vmem, size = 0x9000, scoped, tag = 'internal scratch']
  #allocation2 [shape = 'bf16[128,128]{1,0:T(8,128)(2,1)}', space=vmem, size = 0x8000, scoped, tag = 'scratch operand']
  #allocation3 [shape = 'bf16[128,128]{1,0:T(8,128)(2,1)}', space=vmem, size = 0x8000, scoped, tag = 'scratch operand']
  %s0 = inlined_call_operand.hbm [shape: bf16[2,16,128], index: 0, kind: input, shape index: {}]
  %s1 = inlined_call_operand.hbm [shape: bf16[2,128,128], index: 1, kind: input, shape index: {}]
  %s2 = inlined_call_operand.hbm [shape: bf16[128,128], index: 2, kind: input, shape index: {}]
  %s3 = inlined_call_operand.hbm [shape: bf16[128,128], index: 3, kind: input, shape index: {}]
  %s4 = inlined_call_operand.hbm [shape: bf16[128,128], index: 4, kind: input, shape index: {}]
  %s5 = inlined_call_operand.hbm [shape: bf16[128,128], index: 5, kind: input, shape index: {}]
  %s6 = inlined_call_operand.vmem [shape: f32[1,128], index: 6, kind: input, shape index: {}]
  %s7 = inlined_call_operand.vmem [shape: f32[1,128], index: 7, kind: input, shape index: {}]
  %s8 = inlined_call_operand.vmem [shape: f32[1,128], index: 8, kind: input, shape index: {}]
  %s9 = inlined_call_operand.vmem [shape: f32[1,128], index: 9, kind: input, shape index: {}]
  %s10 = inlined_call_operand.hbm [shape: f32[2,16,128], index: 10, kind: output, shape index: {}]
  %s11 = sld [smem:[#allocation0]]
  $region101: #{tpu_custom_call.1} parent=0
    _
  %s13 = ssub.s32 1, %s11
  %s14 = scalar_select 0, %s13, %s11
  $region1: #{tpu_custom_call.1} parent=0
    #allocation4 [shape = 'u8[8192]{0}', space=vmem, size = 0x2000, scoped, tag = 'input window, operand 0']
    #allocation5 [shape = 's32[2]{0}', space=sflag, size = 0x8, scoped, tag = 'scoped memory for tpu_custom_call.1']
    #allocation6 [shape = 's32[2]{0}', space=sflag, size = 0x8, scoped, tag = 'scoped memory for tpu_custom_call.1']
    #allocation7 [shape = 'u8[65536]{0}', space=vmem, size = 0x10000, scoped, tag = 'input window, operand 1']
    #allocation8 [shape = 's32[2]{0}', space=sflag, size = 0x8, scoped, tag = 'scoped memory for tpu_custom_call.1']
    #allocation9 [shape = 'u8[32768]{0}', space=vmem, size = 0x8000, scoped, tag = 'input window, operand 2, single buffered']
    #allocation10 [shape = 'u8[32768]{0}', space=vmem, size = 0x8000, scoped, tag = 'input window, operand 3, single buffered']
    #allocation11 [shape = 's32[1]{0}', space=sflag, size = 0x4, scoped, tag = 'scoped memory for tpu_custom_call.1']
    #allocation12 [shape = 'u8[32768]{0}', space=vmem, size = 0x8000, scoped, tag = 'input window, operand 4, single buffered']
    #allocation13 [shape = 'u8[32768]{0}', space=vmem, size = 0x8000, scoped, tag = 'input window, operand 5, single buffered']
    #allocation14 [shape = 's32[1]{0}', space=sflag, size = 0x4, scoped, tag = 'scoped memory for tpu_custom_call.1']
    #allocation15 [shape = 'u8[16384]{0}', space=vmem, size = 0x4000, scoped, tag = 'output window, operand 0']
    %15 = vsyncpa [#allocation5], 0
    %s16 = scalar_lea.sflag [#allocation5], 1
    %17 = vsyncpa %s16, 0
    %18 = vsyncpa [#allocation8], 0
    %s19 = scalar_lea.sflag [#allocation8], 1
    %20 = vsyncpa %s19, 0
    %21 = vsyncpa [#allocation11], 0
    %22 = vsyncpa [#allocation14], 0
    %23 = vsyncpa [#allocation6], 0
    %s24 = scalar_lea.sflag [#allocation6], 1
    %25 = vsyncpa %s24, 0
    loop: start=0, step=1, limit=4
    $region2: #{tpu_custom_call.1} parent=1 // loop_pre_header
      _
    $region3: #{tpu_custom_call.1} parent=1 // loop_header
      %s27 = sphi 0, %s31
      %p28 = scmp.ge.s32.totalorder %s27, 4
      %s34 = sphi 0, %s46
      %s35 = sphi 0, %s42
      %s36 = sphi 0, %s34
      %s37 = sphi 0, %s35
      %s38 = sphi 0, %s36
      %s39 = sphi 0, %s37
      %s51 = sphi 0, %s53
      %s54 = sphi 0, %s51
      %s55 = sphi 0, %s54
      %s71 = sphi 0, %s55
      %s77 = sphi 0, %s79
      %s80 = sphi 0, %s77
      %s81 = sphi 0, %s80
      %s97 = sphi 0, %s81
      %s101 = sphi 0, %s101
      %s103 = sphi 0, %s101
      %s104 = sphi 0, %s103
      %s118 = sphi 0, %s104
      %s122 = sphi 0, %s122
      %s124 = sphi 0, %s122
      %s125 = sphi 0, %s124
      %s139 = sphi 0, %s125
      %s143 = sphi 0, %s143
      %s145 = sphi 0, %s143
      %s146 = sphi 0, %s145
      %s160 = sphi 0, %s146
      %s164 = sphi 0, %s164
      %s166 = sphi 0, %s164
      %s167 = sphi 0, %s166
      %s181 = sphi 0, %s167
      %s185 = sphi 0, %s185
      %s187 = sphi 0, %s185
      %s188 = sphi 0, %s187
      %s202 = sphi 0, %s188
      %s206 = sphi 0, %s206
      %s208 = sphi 0, %s206
      %s209 = sphi 0, %s208
      %s223 = sphi 0, %s209
      %s227 = sphi 0, %s227
      %s229 = sphi 0, %s227
      %s230 = sphi 0, %s229
      %s244 = sphi 0, %s230
      %s248 = sphi 0, %s248
      %s250 = sphi 0, %s248
      %s251 = sphi 0, %s250
      %s265 = sphi 0, %s251
      %s273 = sphi 0, %s275
      %s276 = sphi 0, %s273
      %s277 = sphi 0, %s276
      %s293 = sphi 0, %s277
    $region4: #{tpu_custom_call.1} parent=1 // loop_header_branch
      %30 = sbr.rel (%p28) target = $region8
    $region5: #{tpu_custom_call.1} parent=1 // loop_body
      %s32 = ssub.s32 %s27, 1
      %s33 = ssub.s32 %s27, 2
      %s40 = sadd.s32 1, %s35
      %p41 = scmp.ge.s32.totalorder %s40, 1
      %s42 = scalar_select %p41, 0, %s40
      %s43 = sadd.s32 1, %s34
      %s44 = scalar_select %p41, %s43, %s34
      %p45 = scmp.ge.s32.totalorder %s44, 2
      %s46 = scalar_select %p45, 0, %s44
      %s47 = ssub.s32 %s34, %s46
      %s48 = ssub.s32 %s35, %s42
      %s49 = sor.u32 %s47, %s48
      %p50 = scmp.eq.s32.totalorder %s49, 0
      %s52 = sadd.s32 %s51, 1
      %s53 = scalar_select %p50, %s51, %s52
      %p56 = pneg %p50
      %p57 = scmp.eq.s32.totalorder %s27, 1
      %p58 = por %p56, %p57
      %p59 = scmp.ne.s32.totalorder %s51, %s54
      %p60 = scmp.eq.s32.totalorder %s27, 0
      %p61 = por %p59, %p60
      %p62 = scmp.ne.s32.totalorder %s51, %s54
      %p63 = scmp.eq.s32.totalorder %s32, 1
      %p64 = por %p62, %p63
      %p65 = scmp.ne.s32.totalorder %s54, %s55
      %p66 = scmp.eq.s32.totalorder %s32, 0
      %p67 = por %p65, %p66
      %p68 = scmp.ne.s32.totalorder %s54, %s55
      %p69 = scmp.eq.s32.totalorder %s33, 1
      %p70 = por %p68, %p69
      %p72 = scmp.ne.s32.totalorder %s55, %s71
      %p73 = scmp.eq.s32.totalorder %s33, 0
      %p74 = por %p72, %p73
      %s75 = ssub.s32 %s34, %s46
      %p76 = scmp.eq.s32.totalorder %s75, 0
      %s78 = sadd.s32 %s77, 1
      %s79 = scalar_select %p76, %s77, %s78
      %p82 = pneg %p76
      %p83 = scmp.eq.s32.totalorder %s27, 1
      %p84 = por %p82, %p83
      %p85 = scmp.ne.s32.totalorder %s77, %s80
      %p86 = scmp.eq.s32.totalorder %s27, 0
      %p87 = por %p85, %p86
      %p88 = scmp.ne.s32.totalorder %s77, %s80
      %p89 = scmp.eq.s32.totalorder %s32, 1
      %p90 = por %p88, %p89
      %p91 = scmp.ne.s32.totalorder %s80, %s81
      %p92 = scmp.eq.s32.totalorder %s32, 0
      %p93 = por %p91, %p92
      %p94 = scmp.ne.s32.totalorder %s80, %s81
      %p95 = scmp.eq.s32.totalorder %s33, 1
      %p96 = por %p94, %p95
      %p98 = scmp.ne.s32.totalorder %s81, %s97
      %p99 = scmp.eq.s32.totalorder %s33, 0
      %p100 = por %p98, %p99
      %s102 = sadd.s32 %s101, 1
      %p105 = scmp.eq.s32.totalorder %s27, 1
      %p106 = scmp.ne.s32.totalorder %s101, %s103
      %p107 = scmp.eq.s32.totalorder %s27, 0
      %p108 = por %p106, %p107
      %p109 = scmp.ne.s32.totalorder %s101, %s103
      %p110 = scmp.eq.s32.totalorder %s32, 1
      %p111 = por %p109, %p110
      %p112 = scmp.ne.s32.totalorder %s103, %s104
      %p113 = scmp.eq.s32.totalorder %s32, 0
      %p114 = por %p112, %p113
      %p115 = scmp.ne.s32.totalorder %s103, %s104
      %p116 = scmp.eq.s32.totalorder %s33, 1
      %p117 = por %p115, %p116
      %p119 = scmp.ne.s32.totalorder %s104, %s118
      %p120 = scmp.eq.s32.totalorder %s33, 0
      %p121 = por %p119, %p120
      %s123 = sadd.s32 %s122, 1
      %p126 = scmp.eq.s32.totalorder %s27, 1
      %p127 = scmp.ne.s32.totalorder %s122, %s124
      %p128 = scmp.eq.s32.totalorder %s27, 0
      %p129 = por %p127, %p128
      %p130 = scmp.ne.s32.totalorder %s122, %s124
      %p131 = scmp.eq.s32.totalorder %s32, 1
      %p132 = por %p130, %p131
      %p133 = scmp.ne.s32.totalorder %s124, %s125
      %p134 = scmp.eq.s32.totalorder %s32, 0
      %p135 = por %p133, %p134
      %p136 = scmp.ne.s32.totalorder %s124, %s125
      %p137 = scmp.eq.s32.totalorder %s33, 1
      %p138 = por %p136, %p137
      %p140 = scmp.ne.s32.totalorder %s125, %s139
      %p141 = scmp.eq.s32.totalorder %s33, 0
      %p142 = por %p140, %p141
      %s144 = sadd.s32 %s143, 1
      %p147 = scmp.eq.s32.totalorder %s27, 1
      %p148 = scmp.ne.s32.totalorder %s143, %s145
      %p149 = scmp.eq.s32.totalorder %s27, 0
      %p150 = por %p148, %p149
      %p151 = scmp.ne.s32.totalorder %s143, %s145
      %p152 = scmp.eq.s32.totalorder %s32, 1
      %p153 = por %p151, %p152
      %p154 = scmp.ne.s32.totalorder %s145, %s146
      %p155 = scmp.eq.s32.totalorder %s32, 0
      %p156 = por %p154, %p155
      %p157 = scmp.ne.s32.totalorder %s145, %s146
      %p158 = scmp.eq.s32.totalorder %s33, 1
      %p159 = por %p157, %p158
      %p161 = scmp.ne.s32.totalorder %s146, %s160
      %p162 = scmp.eq.s32.totalorder %s33, 0
      %p163 = por %p161, %p162
      %s165 = sadd.s32 %s164, 1
      %p168 = scmp.eq.s32.totalorder %s27, 1
      %p169 = scmp.ne.s32.totalorder %s164, %s166
      %p170 = scmp.eq.s32.totalorder %s27, 0
      %p171 = por %p169, %p170
      %p172 = scmp.ne.s32.totalorder %s164, %s166
      %p173 = scmp.eq.s32.totalorder %s32, 1
      %p174 = por %p172, %p173
      %p175 = scmp.ne.s32.totalorder %s166, %s167
      %p176 = scmp.eq.s32.totalorder %s32, 0
      %p177 = por %p175, %p176
      %p178 = scmp.ne.s32.totalorder %s166, %s167
      %p179 = scmp.eq.s32.totalorder %s33, 1
      %p180 = por %p178, %p179
      %p182 = scmp.ne.s32.totalorder %s167, %s181
      %p183 = scmp.eq.s32.totalorder %s33, 0
      %p184 = por %p182, %p183
      %s186 = sadd.s32 %s185, 1
      %p189 = scmp.eq.s32.totalorder %s27, 1
      %p190 = scmp.ne.s32.totalorder %s185, %s187
      %p191 = scmp.eq.s32.totalorder %s27, 0
      %p192 = por %p190, %p191
      %p193 = scmp.ne.s32.totalorder %s185, %s187
      %p194 = scmp.eq.s32.totalorder %s32, 1
      %p195 = por %p193, %p194
      %p196 = scmp.ne.s32.totalorder %s187, %s188
      %p197 = scmp.eq.s32.totalorder %s32, 0
      %p198 = por %p196, %p197
      %p199 = scmp.ne.s32.totalorder %s187, %s188
      %p200 = scmp.eq.s32.totalorder %s33, 1
      %p201 = por %p199, %p200
      %p203 = scmp.ne.s32.totalorder %s188, %s202
      %p204 = scmp.eq.s32.totalorder %s33, 0
      %p205 = por %p203, %p204
      %s207 = sadd.s32 %s206, 1
      %p210 = scmp.eq.s32.totalorder %s27, 1
      %p211 = scmp.ne.s32.totalorder %s206, %s208
      %p212 = scmp.eq.s32.totalorder %s27, 0
      %p213 = por %p211, %p212
      %p214 = scmp.ne.s32.totalorder %s206, %s208
      %p215 = scmp.eq.s32.totalorder %s32, 1
      %p216 = por %p214, %p215
      %p217 = scmp.ne.s32.totalorder %s208, %s209
      %p218 = scmp.eq.s32.totalorder %s32, 0
      %p219 = por %p217, %p218
      %p220 = scmp.ne.s32.totalorder %s208, %s209
      %p221 = scmp.eq.s32.totalorder %s33, 1
      %p222 = por %p220, %p221
      %p224 = scmp.ne.s32.totalorder %s209, %s223
      %p225 = scmp.eq.s32.totalorder %s33, 0
      %p226 = por %p224, %p225
      %s228 = sadd.s32 %s227, 1
      %p231 = scmp.eq.s32.totalorder %s27, 1
      %p232 = scmp.ne.s32.totalorder %s227, %s229
      %p233 = scmp.eq.s32.totalorder %s27, 0
      %p234 = por %p232, %p233
      %p235 = scmp.ne.s32.totalorder %s227, %s229
      %p236 = scmp.eq.s32.totalorder %s32, 1
      %p237 = por %p235, %p236
      %p238 = scmp.ne.s32.totalorder %s229, %s230
      %p239 = scmp.eq.s32.totalorder %s32, 0
      %p240 = por %p238, %p239
      %p241 = scmp.ne.s32.totalorder %s229, %s230
      %p242 = scmp.eq.s32.totalorder %s33, 1
      %p243 = por %p241, %p242
      %p245 = scmp.ne.s32.totalorder %s230, %s244
      %p246 = scmp.eq.s32.totalorder %s33, 0
      %p247 = por %p245, %p246
      %s249 = sadd.s32 %s248, 1
      %p252 = scmp.eq.s32.totalorder %s27, 1
      %p253 = scmp.ne.s32.totalorder %s248, %s250
      %p254 = scmp.eq.s32.totalorder %s27, 0
      %p255 = por %p253, %p254
      %p256 = scmp.ne.s32.totalorder %s248, %s250
      %p257 = scmp.eq.s32.totalorder %s32, 1
      %p258 = por %p256, %p257
      %p259 = scmp.ne.s32.totalorder %s250, %s251
      %p260 = scmp.eq.s32.totalorder %s32, 0
      %p261 = por %p259, %p260
      %p262 = scmp.ne.s32.totalorder %s250, %s251
      %p263 = scmp.eq.s32.totalorder %s33, 1
      %p264 = por %p262, %p263
      %p266 = scmp.ne.s32.totalorder %s251, %s265
      %p267 = scmp.eq.s32.totalorder %s33, 0
      %p268 = por %p266, %p267
      %s269 = ssub.s32 %s34, %s46
      %s270 = ssub.s32 %s35, %s42
      %s271 = sor.u32 %s269, %s270
      %p272 = scmp.eq.s32.totalorder %s271, 0
      %s274 = sadd.s32 %s273, 1
      %s275 = scalar_select %p272, %s273, %s274
      %p278 = pneg %p272
      %p279 = scmp.eq.s32.totalorder %s27, 1
      %p280 = por %p278, %p279
      %p281 = scmp.ne.s32.totalorder %s273, %s276
      %p282 = scmp.eq.s32.totalorder %s27, 0
      %p283 = por %p281, %p282
      %p284 = scmp.ne.s32.totalorder %s273, %s276
      %p285 = scmp.eq.s32.totalorder %s32, 1
      %p286 = por %p284, %p285
      %p287 = scmp.ne.s32.totalorder %s276, %s277
      %p288 = scmp.eq.s32.totalorder %s32, 0
      %p289 = por %p287, %p288
      %p290 = scmp.ne.s32.totalorder %s276, %s277
      %p291 = scmp.eq.s32.totalorder %s33, 1
      %p292 = por %p290, %p291
      %p294 = scmp.ne.s32.totalorder %s277, %s293
      %p295 = scmp.eq.s32.totalorder %s33, 0
      %p296 = por %p294, %p295
      %p297 = scmp.le.s32.totalorder 1, %s27
      %p298 = scmp.lt.s32.totalorder %s27, 3
      %p299 = pnand %p297, %p298
      %p300 = pneg %p299
      // Predicated region
      $region9: #{tpu_custom_call.1} parent=5 // pred_check
        _
      $region10: #{tpu_custom_call.1} parent=5 // pred_check_branch
        %302 = sbr.rel (%p299) target = $region12
      $region11: #{tpu_custom_call.1} parent=5 // pred_region
        %s303 = ssub.s32 %s27, 1
        // Predicated region
        $region13: #{tpu_custom_call.1} parent=11 // pred_check
          %p304 = pneg %p114
        $region14: #{tpu_custom_call.1} parent=11 // pred_check_branch
          %306 = sbr.rel (%p304) target = $region16
        $region15: #{tpu_custom_call.1} parent=11 // pred_region
          %308 = vsyncadd [#allocation8], 0
          %s309 = sshll.u32 %s2, 4
          %s310 = int_to_ptr.hbm [resolvable:$true] %s309
          %s311 = sshll.u32 [#allocation9], 4
          %s312 = int_to_ptr.vmem [resolvable:$true] %s311
          %317 = dma.hbm_to_vmem [thread:$0]  %s310, 1024, %s312, [#allocation8], 64, 64, 4
        $region16: #{tpu_custom_call.1} parent=11 // pred_fallthru
          _
        // Predicated region
        $region17: #{tpu_custom_call.1} parent=11 // pred_check
          %p318 = pneg %p135
        $region18: #{tpu_custom_call.1} parent=11 // pred_check_branch
          %320 = sbr.rel (%p318) target = $region20
        $region19: #{tpu_custom_call.1} parent=11 // pred_region
          %322 = vsyncadd [#allocation11], 0
          %s323 = sshll.u32 %s3, 4
          %s324 = int_to_ptr.hbm [resolvable:$true] %s323
          %s325 = sshll.u32 [#allocation10], 4
          %s326 = int_to_ptr.vmem [resolvable:$true] %s325
          %331 = dma.hbm_to_vmem [thread:$0]  %s324, 1024, %s326, [#allocation11], 64, 64, 4
        $region20: #{tpu_custom_call.1} parent=11 // pred_fallthru
          _
        // Predicated region
        $region21: #{tpu_custom_call.1} parent=11 // pred_check
          %p332 = pneg %p156
        $region22: #{tpu_custom_call.1} parent=11 // pred_check_branch
          %334 = sbr.rel (%p332) target = $region24
        $region23: #{tpu_custom_call.1} parent=11 // pred_region
          %336 = vsyncadd [#allocation11], 0
          %s337 = sshll.u32 %s4, 4
          %s338 = int_to_ptr.hbm [resolvable:$true] %s337
          %s339 = sshll.u32 [#allocation12], 4
          %s340 = int_to_ptr.vmem [resolvable:$true] %s339
          %345 = dma.hbm_to_vmem [thread:$0]  %s338, 1024, %s340, [#allocation11], 64, 64, 4
        $region24: #{tpu_custom_call.1} parent=11 // pred_fallthru
          _
        // Predicated region
        $region25: #{tpu_custom_call.1} parent=11 // pred_check
          %p346 = pneg %p177
        $region26: #{tpu_custom_call.1} parent=11 // pred_check_branch
          %348 = sbr.rel (%p346) target = $region28
        $region27: #{tpu_custom_call.1} parent=11 // pred_region
          %350 = vsyncadd [#allocation14], 0
          %s351 = sshll.u32 %s5, 4
          %s352 = int_to_ptr.hbm [resolvable:$true] %s351
          %s353 = sshll.u32 [#allocation13], 4
          %s354 = int_to_ptr.vmem [resolvable:$true] %s353
          %359 = dma.hbm_to_vmem [thread:$0]  %s352, 1024, %s354, [#allocation14], 64, 64, 4
        $region28: #{tpu_custom_call.1} parent=11 // pred_fallthru
          _
        // Predicated region
        $region29: #{tpu_custom_call.1} parent=11 // pred_check
          %p360 = pneg %p198
        $region30: #{tpu_custom_call.1} parent=11 // pred_check_branch
          %362 = sbr.rel (%p360) target = $region32
        $region31: #{tpu_custom_call.1} parent=11 // pred_region
          _
        $region32: #{tpu_custom_call.1} parent=11 // pred_fallthru
          _
        // Predicated region
        $region33: #{tpu_custom_call.1} parent=11 // pred_check
          %p363 = pneg %p219
        $region34: #{tpu_custom_call.1} parent=11 // pred_check_branch
          %365 = sbr.rel (%p363) target = $region36
        $region35: #{tpu_custom_call.1} parent=11 // pred_region
          _
        $region36: #{tpu_custom_call.1} parent=11 // pred_fallthru
          _
        // Predicated region
        $region37: #{tpu_custom_call.1} parent=11 // pred_check
          %p366 = pneg %p240
        $region38: #{tpu_custom_call.1} parent=11 // pred_check_branch
          %368 = sbr.rel (%p366) target = $region40
        $region39: #{tpu_custom_call.1} parent=11 // pred_region
          _
        $region40: #{tpu_custom_call.1} parent=11 // pred_fallthru
          _
        // Predicated region
        $region41: #{tpu_custom_call.1} parent=11 // pred_check
          %p369 = pneg %p261
        $region42: #{tpu_custom_call.1} parent=11 // pred_check_branch
          %371 = sbr.rel (%p369) target = $region44
        $region43: #{tpu_custom_call.1} parent=11 // pred_region
          _
        $region44: #{tpu_custom_call.1} parent=11 // pred_fallthru
          _
      $region12: #{tpu_custom_call.1} parent=5 // pred_fallthru
        _
      %p372 = scmp.lt.s32.totalorder %s27, 2
      // Predicated region
      $region45: #{tpu_custom_call.1} parent=5 // pred_check
        %p373 = pneg %p372
      $region46: #{tpu_custom_call.1} parent=5 // pred_check_branch
        %375 = sbr.rel (%p373) target = $region48
      $region47: #{tpu_custom_call.1} parent=5 // pred_region
        // Predicated region
        $region49: #{tpu_custom_call.1} parent=47 // pred_check
          %p376 = pneg %p61
        $region50: #{tpu_custom_call.1} parent=47 // pred_check_branch
          %378 = sbr.rel (%p376) target = $region52
        $region51: #{tpu_custom_call.1} parent=47 // pred_region
          %s379 = sand.u32 %s51, 1
          %s380 = scalar_lea.sflag [#allocation5], %s379
          %s381 = sand.u32 %s51, 1
          %s382 = smul.addr %s381, 8
          %s383 = scalar_lea.vmem [#allocation4], %s382
          %s384 = smul.u32 2, %s35
          %386 = vsyncadd %s380, 0
          %s387 = smul.addr %s34, 2
          %s388 = sadd.s32 %s384, %s387
          %s389 = smul.addr %s388, 4
          %s390 = scalar_lea.hbm %s0, %s389
          %s391 = sshll.u32 %s390, 4
          %s392 = int_to_ptr.hbm [resolvable:$true] %s391
          %s393 = sshll.u32 %s383, 4
          %s394 = int_to_ptr.vmem [resolvable:$true] %s393
          %399 = dma.hbm_to_vmem [thread:$0]  %s392, 128, %s394, %s380, 64, 64, 4
        $region52: #{tpu_custom_call.1} parent=47 // pred_fallthru
          _
        // Predicated region
        $region53: #{tpu_custom_call.1} parent=47 // pred_check
          %p400 = pneg %p87
        $region54: #{tpu_custom_call.1} parent=47 // pred_check_branch
          %402 = sbr.rel (%p400) target = $region56
        $region55: #{tpu_custom_call.1} parent=47 // pred_region
          %s403 = sand.u32 %s27, 1
          %s404 = scalar_lea.sflag [#allocation8], %s403
          %s405 = sand.u32 %s77, 1
          %s406 = smul.addr %s405, 64
          %s407 = scalar_lea.vmem [#allocation7], %s406
          %409 = vsyncadd %s404, 0
          %s410 = smul.addr %s34, 16
          %s411 = smul.addr %s410, 4
          %s412 = scalar_lea.hbm %s1, %s411
          %s413 = sshll.u32 %s412, 4
          %s414 = int_to_ptr.hbm [resolvable:$true] %s413
          %s415 = sshll.u32 %s407, 4
          %s416 = int_to_ptr.vmem [resolvable:$true] %s415
          %421 = dma.hbm_to_vmem [thread:$0]  %s414, 1024, %s416, %s404, 64, 64, 4
        $region56: #{tpu_custom_call.1} parent=47 // pred_fallthru
          _
      $region48: #{tpu_custom_call.1} parent=5 // pred_fallthru
        _
      %p422 = scmp.le.s32.totalorder 1, %s27
      %p423 = scmp.lt.s32.totalorder %s27, 3
      %p424 = pnand %p422, %p423
      %p425 = pneg %p424
      // Predicated region
      $region57: #{tpu_custom_call.1} parent=5 // pred_check
        _
      $region58: #{tpu_custom_call.1} parent=5 // pred_check_branch
        %427 = sbr.rel (%p424) target = $region60
      $region59: #{tpu_custom_call.1} parent=5 // pred_region
        %s428 = ssub.s32 %s27, 1
        %s429 = sand.u32 %s54, 1
        %s430 = scalar_lea.sflag [#allocation5], %s429
        %s431 = sand.u32 %s54, 1
        %s432 = smul.addr %s431, 8
        %s433 = scalar_lea.vmem [#allocation4], %s432
        // Predicated region
        $region61: #{tpu_custom_call.1} parent=59 // pred_check
          %p434 = pneg %p67
        $region62: #{tpu_custom_call.1} parent=59 // pred_check_branch
          %436 = sbr.rel (%p434) target = $region64
        $region63: #{tpu_custom_call.1} parent=59 // pred_region
          %438 = dma.done %s430, 128
        $region64: #{tpu_custom_call.1} parent=59 // pred_fallthru
          _
        %s439 = sand.u32 %s32, 1
        %s440 = scalar_lea.sflag [#allocation8], %s439
        %s441 = sand.u32 %s80, 1
        %s442 = smul.addr %s441, 64
        %s443 = scalar_lea.vmem [#allocation7], %s442
        // Predicated region
        $region65: #{tpu_custom_call.1} parent=59 // pred_check
          %p444 = pneg %p93
        $region66: #{tpu_custom_call.1} parent=59 // pred_check_branch
          %446 = sbr.rel (%p444) target = $region68
        $region67: #{tpu_custom_call.1} parent=59 // pred_region
          %448 = dma.done %s440, 1024
        $region68: #{tpu_custom_call.1} parent=59 // pred_fallthru
          _
        // Predicated region
        $region69: #{tpu_custom_call.1} parent=59 // pred_check
          %p449 = pneg %p114
        $region70: #{tpu_custom_call.1} parent=59 // pred_check_branch
          %451 = sbr.rel (%p449) target = $region72
        $region71: #{tpu_custom_call.1} parent=59 // pred_region
          %453 = dma.done [#allocation8], 1024
        $region72: #{tpu_custom_call.1} parent=59 // pred_fallthru
          _
        // Predicated region
        $region73: #{tpu_custom_call.1} parent=59 // pred_check
          %p454 = pneg %p135
        $region74: #{tpu_custom_call.1} parent=59 // pred_check_branch
          %456 = sbr.rel (%p454) target = $region76
        $region75: #{tpu_custom_call.1} parent=59 // pred_region
          %458 = dma.done [#allocation11], 1024
        $region76: #{tpu_custom_call.1} parent=59 // pred_fallthru
          _
        // Predicated region
        $region77: #{tpu_custom_call.1} parent=59 // pred_check
          %p459 = pneg %p156
        $region78: #{tpu_custom_call.1} parent=59 // pred_check_branch
          %461 = sbr.rel (%p459) target = $region80
        $region79: #{tpu_custom_call.1} parent=59 // pred_region
          %463 = dma.done [#allocation11], 1024
        $region80: #{tpu_custom_call.1} parent=59 // pred_fallthru
          _
        // Predicated region
        $region81: #{tpu_custom_call.1} parent=59 // pred_check
          %p464 = pneg %p177
        $region82: #{tpu_custom_call.1} parent=59 // pred_check_branch
          %466 = sbr.rel (%p464) target = $region84
        $region83: #{tpu_custom_call.1} parent=59 // pred_region
          %468 = dma.done [#allocation14], 1024
        $region84: #{tpu_custom_call.1} parent=59 // pred_fallthru
          _
        %s469 = sand.u32 %s54, 1
        %s470 = scalar_lea.sflag [#allocation5], %s469
        %s471 = sand.u32 %s54, 1
        %s472 = smul.addr %s471, 8
        %s473 = scalar_lea.vmem [#allocation4], %s472
        %p474 = pneg %p67
        %p475 = pneg %p64
        %s476 = sand.u32 %s32, 1
        %s477 = scalar_lea.sflag [#allocation8], %s476
        %s478 = sand.u32 %s80, 1
        %s479 = smul.addr %s478, 64
        %s480 = scalar_lea.vmem [#allocation7], %s479
        %p481 = pneg %p93
        %p482 = pneg %p90
        %p483 = pneg %p114
        %p484 = pneg %p111
        %p485 = pneg %p135
        %p486 = pneg %p132
        %p487 = pneg %p156
        %p488 = pneg %p153
        %p489 = pneg %p177
        %p490 = pneg %p174
        %p491 = pneg %p198
        %p492 = pneg %p195
        %p493 = pneg %p219
        %p494 = pneg %p216
        %p495 = pneg %p240
        %p496 = pneg %p237
        %p497 = pneg %p261
        %p498 = pneg %p258
        %p499 = pneg %p289
        %p500 = pneg %p286
        %s501 = sand.u32 %s276, 1
        %s502 = scalar_lea.sflag [#allocation6], %s501
        %s503 = sand.u32 %s276, 1
        %s504 = smul.addr %s503, 16
        %s505 = scalar_lea.vmem [#allocation15], %s504
        %s506 = smul.u32 2, %s37
        %s507 = smul.u32 2, %s37
        %p508 = scmp.eq.s32.totalorder %s37, 0
        // Predicated region
        $region85: #{tpu_custom_call.1} parent=59 // pred_check
          %p509 = pneg %p508
        $region86: #{tpu_custom_call.1} parent=59 // pred_check_branch
          %511 = sbr.rel (%p509) target = $region88
        $region87: #{tpu_custom_call.1} parent=59 // pred_region
          %v512 = vld [vmem:[%s443] sm:$0xf]
          %v513 = vld [vmem:[%s443 + $0x4] sm:$0xf]
          %v514 = vld [vmem:[%s443 + $0x8] sm:$0xf]
          %v515 = vld [vmem:[%s443 + $0xc] sm:$0xf]
          %v516 = vld [vmem:[%s443 + $0x10] sm:$0xf]
          %v517 = vld [vmem:[%s443 + $0x14] sm:$0xf]
          %v518 = vld [vmem:[%s443 + $0x18] sm:$0xf]
          %v519 = vld [vmem:[%s443 + $0x1c] sm:$0xf]
          %v520 = vld [vmem:[%s443 + $0x20] sm:$0xf]
          %v521 = vld [vmem:[%s443 + $0x24] sm:$0xf]
          %v522 = vld [vmem:[%s443 + $0x28] sm:$0xf]
          %v523 = vld [vmem:[%s443 + $0x2c] sm:$0xf]
          %v524 = vld [vmem:[%s443 + $0x30] sm:$0xf]
          %v525 = vld [vmem:[%s443 + $0x34] sm:$0xf]
          %v526 = vld [vmem:[%s443 + $0x38] sm:$0xf]
          %v527 = vld [vmem:[%s443 + $0x3c] sm:$0xf]
          %v528 = vld [vmem:[#allocation10] sm:$0xf]
          %v529 = vld [vmem:[#allocation10 + $0x4] sm:$0xf]
          %v530 = vld [vmem:[#allocation10 + $0x8] sm:$0xf]
          %v531 = vld [vmem:[#allocation10 + $0xc] sm:$0xf]
          %v532 = vld [vmem:[#allocation10 + $0x10] sm:$0xf]
          %v533 = vld [vmem:[#allocation10 + $0x14] sm:$0xf]
          %v534 = vld [vmem:[#allocation10 + $0x18] sm:$0xf]
          %v535 = vld [vmem:[#allocation10 + $0x1c] sm:$0xf]
          %v536 = vld [vmem:[#allocation10 + $0x20] sm:$0xf]
          %v537 = vld [vmem:[#allocation10 + $0x24] sm:$0xf]
          %v538 = vld [vmem:[#allocation10 + $0x28] sm:$0xf]
          %v539 = vld [vmem:[#allocation10 + $0x2c] sm:$0xf]
          %v540 = vld [vmem:[#allocation10 + $0x30] sm:$0xf]
          %v541 = vld [vmem:[#allocation10 + $0x34] sm:$0xf]
          %v542 = vld [vmem:[#allocation10 + $0x38] sm:$0xf]
          %v543 = vld [vmem:[#allocation10 + $0x3c] sm:$0xf]
          %v544 = vld [vmem:[%s7] sm:$0x1]
          %v546 = vperm.slane %v544, 0
          %v564 = vunpack.c.l.b16 %v512
          %v565 = vunpack.c.l.b16 %v513
          %v566 = vunpack.c.l.b16 %v514
          %v567 = vunpack.c.l.b16 %v515
          %v568 = vunpack.c.l.b16 %v516
          %v569 = vunpack.c.l.b16 %v517
          %v570 = vunpack.c.l.b16 %v518
          %v571 = vunpack.c.l.b16 %v519
          %v572 = vunpack.c.l.b16 %v520
          %v573 = vunpack.c.l.b16 %v521
          %v574 = vunpack.c.l.b16 %v522
          %v575 = vunpack.c.l.b16 %v523
          %v576 = vunpack.c.l.b16 %v524
          %v577 = vunpack.c.l.b16 %v525
          %v578 = vunpack.c.l.b16 %v526
          %v579 = vunpack.c.l.b16 %v527
          %v580 = vpack.c.b16 %v565, %v564
          %v581 = vpack.c.b16 %v567, %v566
          %v582 = vpack.c.b16 %v569, %v568
          %v583 = vpack.c.b16 %v571, %v570
          %v584 = vpack.c.b16 %v573, %v572
          %v585 = vpack.c.b16 %v575, %v574
          %v586 = vpack.c.b16 %v577, %v576
          %v587 = vpack.c.b16 %v579, %v578
          %v612 = vunpack.c.l.b16 %v528
          %v613 = vunpack.c.l.b16 %v529
          %v614 = vunpack.c.l.b16 %v530
          %v615 = vunpack.c.l.b16 %v531
          %v616 = vunpack.c.l.b16 %v532
          %v617 = vunpack.c.l.b16 %v533
          %v618 = vunpack.c.l.b16 %v534
          %v619 = vunpack.c.l.b16 %v535
          %v620 = vunpack.c.l.b16 %v536
          %v621 = vunpack.c.l.b16 %v537
          %v622 = vunpack.c.l.b16 %v538
          %v623 = vunpack.c.l.b16 %v539
          %v624 = vunpack.c.l.b16 %v540
          %v625 = vunpack.c.l.b16 %v541
          %v626 = vunpack.c.l.b16 %v542
          %v627 = vunpack.c.l.b16 %v543
          %v628 = vpack.c.b16 %v613, %v612
          %v629 = vpack.c.b16 %v615, %v614
          %v630 = vpack.c.b16 %v617, %v616
          %v631 = vpack.c.b16 %v619, %v618
          %v632 = vpack.c.b16 %v621, %v620
          %v633 = vpack.c.b16 %v623, %v622
          %v634 = vpack.c.b16 %v625, %v624
          %v635 = vpack.c.b16 %v627, %v626
          %644 = vmatpush.bf16.msra.mxu0 %v635
          %645 = vmatpush.bf16.msra.mxu0 %v634
          %646 = vmatpush.bf16.msra.mxu0 %v633
          %647 = vmatpush.bf16.msra.mxu0 %v632
          %648 = vmatpush.bf16.msra.mxu0 %v631
          %649 = vmatpush.bf16.msra.mxu0 %v630
          %650 = vmatpush.bf16.msra.mxu0 %v629
          %651 = vmatpush.bf16.msra.mxu0 %v628
          %652 = vmatmul.bf16.gmra.mxu0 %v580
          %v653 = vpop.f32.mrf.mxu0
          %v654 = vadd.f32 %v546, %v653
          %v655 = vpop.f32.mrf.mxu0
          %v656 = vadd.f32 %v546, %v655
          %657 = vmatmul.bf16.gmra.mxu0 %v581
          %v658 = vpop.f32.mrf.mxu0
          %v659 = vadd.f32 %v546, %v658
          %v660 = vpop.f32.mrf.mxu0
          %v661 = vadd.f32 %v546, %v660
          %662 = vmatmul.bf16.gmra.mxu0 %v582
          %v663 = vpop.f32.mrf.mxu0
          %v664 = vadd.f32 %v546, %v663
          %v665 = vpop.f32.mrf.mxu0
          %v666 = vadd.f32 %v546, %v665
          %667 = vmatmul.bf16.gmra.mxu0 %v583
          %v668 = vpop.f32.mrf.mxu0
          %v669 = vadd.f32 %v546, %v668
          %v670 = vpop.f32.mrf.mxu0
          %v671 = vadd.f32 %v546, %v670
          %672 = vmatmul.bf16.gmra.mxu0 %v584
          %v673 = vpop.f32.mrf.mxu0
          %v674 = vadd.f32 %v546, %v673
          %v675 = vpop.f32.mrf.mxu0
          %v676 = vadd.f32 %v546, %v675
          %677 = vmatmul.bf16.gmra.mxu0 %v585
          %v678 = vpop.f32.mrf.mxu0
          %v679 = vadd.f32 %v546, %v678
          %v680 = vpop.f32.mrf.mxu0
          %v681 = vadd.f32 %v546, %v680
          %682 = vmatmul.bf16.gmra.mxu0 %v586
          %v683 = vpop.f32.mrf.mxu0
          %v684 = vadd.f32 %v546, %v683
          %v685 = vpop.f32.mrf.mxu0
          %v686 = vadd.f32 %v546, %v685
          %687 = vmatmul.bf16.gmra.mxu0 %v587
          %v688 = vpop.f32.mrf.mxu0
          %v689 = vadd.f32 %v546, %v688
          %v690 = vpop.f32.mrf.mxu0
          %v691 = vadd.f32 %v546, %v690
          %692 = vdwg.mxu0
          %v693 = vld [vmem:[#allocation12] sm:$0xf]
          %v694 = vld [vmem:[#allocation12 + $0x4] sm:$0xf]
          %v695 = vld [vmem:[#allocation12 + $0x8] sm:$0xf]
          %v696 = vld [vmem:[#allocation12 + $0xc] sm:$0xf]
          %v697 = vld [vmem:[#allocation12 + $0x10] sm:$0xf]
          %v698 = vld [vmem:[#allocation12 + $0x14] sm:$0xf]
          %v699 = vld [vmem:[#allocation12 + $0x18] sm:$0xf]
          %v700 = vld [vmem:[#allocation12 + $0x1c] sm:$0xf]
          %v701 = vld [vmem:[#allocation12 + $0x20] sm:$0xf]
          %v702 = vld [vmem:[#allocation12 + $0x24] sm:$0xf]
          %v703 = vld [vmem:[#allocation12 + $0x28] sm:$0xf]
          %v704 = vld [vmem:[#allocation12 + $0x2c] sm:$0xf]
          %v705 = vld [vmem:[#allocation12 + $0x30] sm:$0xf]
          %v706 = vld [vmem:[#allocation12 + $0x34] sm:$0xf]
          %v707 = vld [vmem:[#allocation12 + $0x38] sm:$0xf]
          %v708 = vld [vmem:[#allocation12 + $0x3c] sm:$0xf]
          %v709 = vld [vmem:[%s8] sm:$0x1]
          %v711 = vperm.slane %v709, 0
          %v729 = vunpack.c.l.b16 %v693
          %v730 = vunpack.c.l.b16 %v694
          %v731 = vunpack.c.l.b16 %v695
          %v732 = vunpack.c.l.b16 %v696
          %v733 = vunpack.c.l.b16 %v697
          %v734 = vunpack.c.l.b16 %v698
          %v735 = vunpack.c.l.b16 %v699
          %v736 = vunpack.c.l.b16 %v700
          %v737 = vunpack.c.l.b16 %v701
          %v738 = vunpack.c.l.b16 %v702
          %v739 = vunpack.c.l.b16 %v703
          %v740 = vunpack.c.l.b16 %v704
          %v741 = vunpack.c.l.b16 %v705
          %v742 = vunpack.c.l.b16 %v706
          %v743 = vunpack.c.l.b16 %v707
          %v744 = vunpack.c.l.b16 %v708
          %v745 = vpack.c.b16 %v730, %v729
          %v746 = vpack.c.b16 %v732, %v731
          %v747 = vpack.c.b16 %v734, %v733
          %v748 = vpack.c.b16 %v736, %v735
          %v749 = vpack.c.b16 %v738, %v737
          %v750 = vpack.c.b16 %v740, %v739
          %v751 = vpack.c.b16 %v742, %v741
          %v752 = vpack.c.b16 %v744, %v743
          %761 = vmatpush.bf16.msra.mxu0 %v752
          %762 = vmatpush.bf16.msra.mxu0 %v751
          %763 = vmatpush.bf16.msra.mxu0 %v750
          %764 = vmatpush.bf16.msra.mxu0 %v749
          %765 = vmatpush.bf16.msra.mxu0 %v748
          %766 = vmatpush.bf16.msra.mxu0 %v747
          %767 = vmatpush.bf16.msra.mxu0 %v746
          %768 = vmatpush.bf16.msra.mxu0 %v745
          %769 = vmatmul.bf16.gmra.mxu0 %v580
          %v770 = vpop.f32.mrf.mxu0
          %v771 = vadd.f32 %v711, %v770
          %v772 = vpop.f32.mrf.mxu0
          %v773 = vadd.f32 %v711, %v772
          %774 = vmatmul.bf16.gmra.mxu0 %v581
          %v775 = vpop.f32.mrf.mxu0
          %v776 = vadd.f32 %v711, %v775
          %v777 = vpop.f32.mrf.mxu0
          %v778 = vadd.f32 %v711, %v777
          %779 = vmatmul.bf16.gmra.mxu0 %v582
          %v780 = vpop.f32.mrf.mxu0
          %v781 = vadd.f32 %v711, %v780
          %v782 = vpop.f32.mrf.mxu0
          %v783 = vadd.f32 %v711, %v782
          %784 = vmatmul.bf16.gmra.mxu0 %v583
          %v785 = vpop.f32.mrf.mxu0
          %v786 = vadd.f32 %v711, %v785
          %v787 = vpop.f32.mrf.mxu0
          %v788 = vadd.f32 %v711, %v787
          %789 = vmatmul.bf16.gmra.mxu0 %v584
          %v790 = vpop.f32.mrf.mxu0
          %v791 = vadd.f32 %v711, %v790
          %v792 = vpop.f32.mrf.mxu0
          %v793 = vadd.f32 %v711, %v792
          %794 = vmatmul.bf16.gmra.mxu0 %v585
          %v795 = vpop.f32.mrf.mxu0
          %v796 = vadd.f32 %v711, %v795
          %v797 = vpop.f32.mrf.mxu0
          %v798 = vadd.f32 %v711, %v797
          %799 = vmatmul.bf16.gmra.mxu0 %v586
          %v800 = vpop.f32.mrf.mxu0
          %v801 = vadd.f32 %v711, %v800
          %v802 = vpop.f32.mrf.mxu0
          %v803 = vadd.f32 %v711, %v802
          %804 = vmatmul.bf16.gmra.mxu0 %v587
          %v805 = vpop.f32.mrf.mxu0
          %v806 = vadd.f32 %v711, %v805
          %v807 = vpop.f32.mrf.mxu0
          %v808 = vadd.f32 %v711, %v807
          %809 = vdwg.mxu0
          %810 = vxpose.xlu0.b32.start [1/16] %v654, 128
          %811 = vxpose.xlu0.b32.cont [2/16] %v656, 128
          %812 = vxpose.xlu0.b32.cont [3/16] %v659, 128
          %813 = vxpose.xlu0.b32.cont [4/16] %v661, 128
          %814 = vxpose.xlu0.b32.cont [5/16] %v664, 128
          %815 = vxpose.xlu0.b32.cont [6/16] %v666, 128
          %816 = vxpose.xlu0.b32.cont [7/16] %v669, 128
          %817 = vxpose.xlu0.b32.cont [8/16] %v671, 128
          %818 = vxpose.xlu0.b32.cont [9/16] %v674, 128
          %819 = vxpose.xlu0.b32.cont [10/16] %v676, 128
          %820 = vxpose.xlu0.b32.cont [11/16] %v679, 128
          %821 = vxpose.xlu0.b32.cont [12/16] %v681, 128
          %822 = vxpose.xlu0.b32.cont [13/16] %v684, 128
          %823 = vxpose.xlu0.b32.cont [14/16] %v686, 128
          %824 = vxpose.xlu0.b32.cont [15/16] %v689, 128
          %825 = vxpose.xlu0.b32.end [16/16] %v691, 128
          %v826 = vpop.trf.xlu0
          %v827 = vpop.trf.xlu0
          %v828 = vpop.trf.xlu0
          %v829 = vpop.trf.xlu0
          %v830 = vpop.trf.xlu0
          %v831 = vpop.trf.xlu0
          %v832 = vpop.trf.xlu0
          %v833 = vpop.trf.xlu0
          %v834 = vpop.trf.xlu0
          %v835 = vpop.trf.xlu0
          %v836 = vpop.trf.xlu0
          %v837 = vpop.trf.xlu0
          %v838 = vpop.trf.xlu0
          %v839 = vpop.trf.xlu0
          %v840 = vpop.trf.xlu0
          %v841 = vpop.trf.xlu0
          %v842 = vpack.c.bf16 %v826, %v826
          %v843 = vpack.c.bf16 %v827, %v827
          %v844 = vpack.c.bf16 %v828, %v828
          %v845 = vpack.c.bf16 %v829, %v829
          %v846 = vpack.c.bf16 %v830, %v830
          %v847 = vpack.c.bf16 %v831, %v831
          %v848 = vpack.c.bf16 %v832, %v832
          %v849 = vpack.c.bf16 %v833, %v833
          %v850 = vpack.c.bf16 %v834, %v834
          %v851 = vpack.c.bf16 %v835, %v835
          %v852 = vpack.c.bf16 %v836, %v836
          %v853 = vpack.c.bf16 %v837, %v837
          %v854 = vpack.c.bf16 %v838, %v838
          %v855 = vpack.c.bf16 %v839, %v839
          %v856 = vpack.c.bf16 %v840, %v840
          %v857 = vpack.c.bf16 %v841, %v841
          %858 = vst [vmem:[#allocation2] sm:$0xf] %v842
          %859 = vst [vmem:[#allocation2 + $0x4] sm:$0xf] %v843
          %860 = vst [vmem:[#allocation2 + $0x8] sm:$0xf] %v844
          %861 = vst [vmem:[#allocation2 + $0xc] sm:$0xf] %v845
          %862 = vst [vmem:[#allocation2 + $0x10] sm:$0xf] %v846
          %863 = vst [vmem:[#allocation2 + $0x14] sm:$0xf] %v847
          %864 = vst [vmem:[#allocation2 + $0x18] sm:$0xf] %v848
          %865 = vst [vmem:[#allocation2 + $0x1c] sm:$0xf] %v849
          %866 = vst [vmem:[#allocation2 + $0x20] sm:$0xf] %v850
          %867 = vst [vmem:[#allocation2 + $0x24] sm:$0xf] %v851
          %868 = vst [vmem:[#allocation2 + $0x28] sm:$0xf] %v852
          %869 = vst [vmem:[#allocation2 + $0x2c] sm:$0xf] %v853
          %870 = vst [vmem:[#allocation2 + $0x30] sm:$0xf] %v854
          %871 = vst [vmem:[#allocation2 + $0x34] sm:$0xf] %v855
          %872 = vst [vmem:[#allocation2 + $0x38] sm:$0xf] %v856
          %873 = vst [vmem:[#allocation2 + $0x3c] sm:$0xf] %v857
          %v874 = vpack.c.bf16 %v771, %v771
          %v875 = vpack.c.bf16 %v773, %v773
          %v876 = vpack.c.bf16 %v776, %v776
          %v877 = vpack.c.bf16 %v778, %v778
          %v878 = vpack.c.bf16 %v781, %v781
          %v879 = vpack.c.bf16 %v783, %v783
          %v880 = vpack.c.bf16 %v786, %v786
          %v881 = vpack.c.bf16 %v788, %v788
          %v882 = vpack.c.bf16 %v791, %v791
          %v883 = vpack.c.bf16 %v793, %v793
          %v884 = vpack.c.bf16 %v796, %v796
          %v885 = vpack.c.bf16 %v798, %v798
          %v886 = vpack.c.bf16 %v801, %v801
          %v887 = vpack.c.bf16 %v803, %v803
          %v888 = vpack.c.bf16 %v806, %v806
          %v889 = vpack.c.bf16 %v808, %v808
          %890 = vst [vmem:[#allocation3] sm:$0xf] %v874
          %891 = vst [vmem:[#allocation3 + $0x4] sm:$0xf] %v875
          %892 = vst [vmem:[#allocation3 + $0x8] sm:$0xf] %v876
          %893 = vst [vmem:[#allocation3 + $0xc] sm:$0xf] %v877
          %894 = vst [vmem:[#allocation3 + $0x10] sm:$0xf] %v878
          %895 = vst [vmem:[#allocation3 + $0x14] sm:$0xf] %v879
          %896 = vst [vmem:[#allocation3 + $0x18] sm:$0xf] %v880
          %897 = vst [vmem:[#allocation3 + $0x1c] sm:$0xf] %v881
          %898 = vst [vmem:[#allocation3 + $0x20] sm:$0xf] %v882
          %899 = vst [vmem:[#allocation3 + $0x24] sm:$0xf] %v883
          %900 = vst [vmem:[#allocation3 + $0x28] sm:$0xf] %v884
          %901 = vst [vmem:[#allocation3 + $0x2c] sm:$0xf] %v885
          %902 = vst [vmem:[#allocation3 + $0x30] sm:$0xf] %v886
          %903 = vst [vmem:[#allocation3 + $0x34] sm:$0xf] %v887
          %904 = vst [vmem:[#allocation3 + $0x38] sm:$0xf] %v888
          %905 = vst [vmem:[#allocation3 + $0x3c] sm:$0xf] %v889
        $region88: #{tpu_custom_call.1} parent=59 // pred_fallthru
          _
        %v906 = vld [vmem:[%s433] sm:$0xf]
        %v907 = vld [vmem:[%s433 + $0x4] sm:$0xf]
        %v908 = vld [vmem:[#allocation9] sm:$0xf]
        %v909 = vld [vmem:[#allocation9 + $0x4] sm:$0xf]
        %v910 = vld [vmem:[#allocation9 + $0x8] sm:$0xf]
        %v911 = vld [vmem:[#allocation9 + $0xc] sm:$0xf]
        %v912 = vld [vmem:[#allocation9 + $0x10] sm:$0xf]
        %v913 = vld [vmem:[#allocation9 + $0x14] sm:$0xf]
        %v914 = vld [vmem:[#allocation9 + $0x18] sm:$0xf]
        %v915 = vld [vmem:[#allocation9 + $0x1c] sm:$0xf]
        %v916 = vld [vmem:[#allocation9 + $0x20] sm:$0xf]
        %v917 = vld [vmem:[#allocation9 + $0x24] sm:$0xf]
        %v918 = vld [vmem:[#allocation9 + $0x28] sm:$0xf]
        %v919 = vld [vmem:[#allocation9 + $0x2c] sm:$0xf]
        %v920 = vld [vmem:[#allocation9 + $0x30] sm:$0xf]
        %v921 = vld [vmem:[#allocation9 + $0x34] sm:$0xf]
        %v922 = vld [vmem:[#allocation9 + $0x38] sm:$0xf]
        %v923 = vld [vmem:[#allocation9 + $0x3c] sm:$0xf]
        %v924 = vld [vmem:[%s6] sm:$0x1]
        %v926 = vperm.slane %v924, 0
        %v930 = vunpack.c.l.b16 %v906
        %v931 = vunpack.c.l.b16 %v907
        %v932 = vpack.c.b16 %v931, %v930
        %v950 = vunpack.c.l.b16 %v908
        %v951 = vunpack.c.l.b16 %v909
        %v952 = vunpack.c.l.b16 %v910
        %v953 = vunpack.c.l.b16 %v911
        %v954 = vunpack.c.l.b16 %v912
        %v955 = vunpack.c.l.b16 %v913
        %v956 = vunpack.c.l.b16 %v914
        %v957 = vunpack.c.l.b16 %v915
        %v958 = vunpack.c.l.b16 %v916
        %v959 = vunpack.c.l.b16 %v917
        %v960 = vunpack.c.l.b16 %v918
        %v961 = vunpack.c.l.b16 %v919
        %v962 = vunpack.c.l.b16 %v920
        %v963 = vunpack.c.l.b16 %v921
        %v964 = vunpack.c.l.b16 %v922
        %v965 = vunpack.c.l.b16 %v923
        %v966 = vpack.c.b16 %v951, %v950
        %v967 = vpack.c.b16 %v953, %v952
        %v968 = vpack.c.b16 %v955, %v954
        %v969 = vpack.c.b16 %v957, %v956
        %v970 = vpack.c.b16 %v959, %v958
        %v971 = vpack.c.b16 %v961, %v960
        %v972 = vpack.c.b16 %v963, %v962
        %v973 = vpack.c.b16 %v965, %v964
        %982 = vmatpush.bf16.msra.mxu0 %v973
        %983 = vmatpush.bf16.msra.mxu0 %v972
        %984 = vmatpush.bf16.msra.mxu0 %v971
        %985 = vmatpush.bf16.msra.mxu0 %v970
        %986 = vmatpush.bf16.msra.mxu0 %v969
        %987 = vmatpush.bf16.msra.mxu0 %v968
        %988 = vmatpush.bf16.msra.mxu0 %v967
        %989 = vmatpush.bf16.msra.mxu0 %v966
        %990 = vmatmul.bf16.gmra.mxu0 %v932
        %v991 = vpop.f32.mrf.mxu0
        %v992 = vadd.f32 %v926, %v991
        %v993 = vpop.f32.mrf.mxu0
        %v994 = vadd.f32 %v926, %v993
        %995 = vdwg.mxu0
        %v996 = vpack.c.bf16 %v994, %v992
        %v997 = vld [vmem:[#allocation2] sm:$0xf]
        %v998 = vld [vmem:[#allocation2 + $0x4] sm:$0xf]
        %v999 = vld [vmem:[#allocation2 + $0x8] sm:$0xf]
        %v1000 = vld [vmem:[#allocation2 + $0xc] sm:$0xf]
        %v1001 = vld [vmem:[#allocation2 + $0x10] sm:$0xf]
        %v1002 = vld [vmem:[#allocation2 + $0x14] sm:$0xf]
        %v1003 = vld [vmem:[#allocation2 + $0x18] sm:$0xf]
        %v1004 = vld [vmem:[#allocation2 + $0x1c] sm:$0xf]
        %v1005 = vld [vmem:[#allocation2 + $0x20] sm:$0xf]
        %v1006 = vld [vmem:[#allocation2 + $0x24] sm:$0xf]
        %v1007 = vld [vmem:[#allocation2 + $0x28] sm:$0xf]
        %v1008 = vld [vmem:[#allocation2 + $0x2c] sm:$0xf]
        %v1009 = vld [vmem:[#allocation2 + $0x30] sm:$0xf]
        %v1010 = vld [vmem:[#allocation2 + $0x34] sm:$0xf]
        %v1011 = vld [vmem:[#allocation2 + $0x38] sm:$0xf]
        %v1012 = vld [vmem:[#allocation2 + $0x3c] sm:$0xf]
        %v1029 = vunpack.c.l.b16 %v997
        %v1030 = vunpack.c.l.b16 %v998
        %v1031 = vunpack.c.l.b16 %v999
        %v1032 = vunpack.c.l.b16 %v1000
        %v1033 = vunpack.c.l.b16 %v1001
        %v1034 = vunpack.c.l.b16 %v1002
        %v1035 = vunpack.c.l.b16 %v1003
        %v1036 = vunpack.c.l.b16 %v1004
        %v1037 = vunpack.c.l.b16 %v1005
        %v1038 = vunpack.c.l.b16 %v1006
        %v1039 = vunpack.c.l.b16 %v1007
        %v1040 = vunpack.c.l.b16 %v1008
        %v1041 = vunpack.c.l.b16 %v1009
        %v1042 = vunpack.c.l.b16 %v1010
        %v1043 = vunpack.c.l.b16 %v1011
        %v1044 = vunpack.c.l.b16 %v1012
        %v1045 = vpack.c.b16 %v1030, %v1029
        %v1046 = vpack.c.b16 %v1032, %v1031
        %v1047 = vpack.c.b16 %v1034, %v1033
        %v1048 = vpack.c.b16 %v1036, %v1035
        %v1049 = vpack.c.b16 %v1038, %v1037
        %v1050 = vpack.c.b16 %v1040, %v1039
        %v1051 = vpack.c.b16 %v1042, %v1041
        %v1052 = vpack.c.b16 %v1044, %v1043
        %1061 = vmatpush.bf16.msra.mxu0 %v1052
        %1062 = vmatpush.bf16.msra.mxu0 %v1051
        %1063 = vmatpush.bf16.msra.mxu0 %v1050
        %1064 = vmatpush.bf16.msra.mxu0 %v1049
        %1065 = vmatpush.bf16.msra.mxu0 %v1048
        %1066 = vmatpush.bf16.msra.mxu0 %v1047
        %1067 = vmatpush.bf16.msra.mxu0 %v1046
        %1068 = vmatpush.bf16.msra.mxu0 %v1045
        %1069 = vmatmul.bf16.gmra.mxu0 %v996
        %v1070 = vpop.f32.mrf.mxu0
        %v1071 = vadd.f32 0.0, %v1070
        %v1072 = vpop.f32.mrf.mxu0
        %v1073 = vadd.f32 0.0, %v1072
        %1074 = vdwg.mxu0
        %v1075 = vmul.f32 %v1071, 0.088388346
        %v1076 = vmul.f32 %v1073, 0.088388346
        %v1077 = vlaneseq
        %v1078 = vand.u32 %v1077, 127
        %vm1079 = vcmp.lt.s32.totalorder %v1078, 10
        %v1080 = vsel %vm1079, %v1075, -1e+30
        %v1081 = vsel %vm1079, %v1076, -1e+30
        %1082 = vmax.xlane.f32.xlu0 %v1080
        %v1083 = vpop.xlane.xlu0 %1082
        %1084 = vmax.xlane.f32.xlu0 %v1081
        %v1085 = vpop.xlane.xlu0 %1084
        %v1086 = vsub.f32 %v1080, %v1083
        %v1087 = vsub.f32 %v1081, %v1085
        %v1088 = vmul.f32 %v1086, 1.442695
        %v1089 = vpow.pop %v1088
        %v1090 = vmul.f32 %v1087, 1.442695
        %v1091 = vpow.pop %v1090
        %1092 = vadd.xlane.f32.xlu0 %v1089
        %v1093 = vpop.xlane.xlu0 %1092
        %1094 = vadd.xlane.f32.xlu0 %v1091
        %v1095 = vpop.xlane.xlu0 %1094
        %v1096 = vrcp.pop %v1093
        %v1097 = vrcp.pop %v1095
        %v1098 = vmul.f32 %v1089, %v1096
        %v1099 = vmul.f32 %v1091, %v1097
        %v1100 = vpack.c.bf16 %v1099, %v1098
        %v1101 = vld [vmem:[#allocation3] sm:$0xf]
        %v1102 = vld [vmem:[#allocation3 + $0x4] sm:$0xf]
        %v1103 = vld [vmem:[#allocation3 + $0x8] sm:$0xf]
        %v1104 = vld [vmem:[#allocation3 + $0xc] sm:$0xf]
        %v1105 = vld [vmem:[#allocation3 + $0x10] sm:$0xf]
        %v1106 = vld [vmem:[#allocation3 + $0x14] sm:$0xf]
        %v1107 = vld [vmem:[#allocation3 + $0x18] sm:$0xf]
        %v1108 = vld [vmem:[#allocation3 + $0x1c] sm:$0xf]
        %v1109 = vld [vmem:[#allocation3 + $0x20] sm:$0xf]
        %v1110 = vld [vmem:[#allocation3 + $0x24] sm:$0xf]
        %v1111 = vld [vmem:[#allocation3 + $0x28] sm:$0xf]
        %v1112 = vld [vmem:[#allocation3 + $0x2c] sm:$0xf]
        %v1113 = vld [vmem:[#allocation3 + $0x30] sm:$0xf]
        %v1114 = vld [vmem:[#allocation3 + $0x34] sm:$0xf]
        %v1115 = vld [vmem:[#allocation3 + $0x38] sm:$0xf]
        %v1116 = vld [vmem:[#allocation3 + $0x3c] sm:$0xf]
        %v1133 = vunpack.c.l.b16 %v1101
        %v1134 = vunpack.c.l.b16 %v1102
        %v1135 = vunpack.c.l.b16 %v1103
        %v1136 = vunpack.c.l.b16 %v1104
        %v1137 = vunpack.c.l.b16 %v1105
        %v1138 = vunpack.c.l.b16 %v1106
        %v1139 = vunpack.c.l.b16 %v1107
        %v1140 = vunpack.c.l.b16 %v1108
        %v1141 = vunpack.c.l.b16 %v1109
        %v1142 = vunpack.c.l.b16 %v1110
        %v1143 = vunpack.c.l.b16 %v1111
        %v1144 = vunpack.c.l.b16 %v1112
        %v1145 = vunpack.c.l.b16 %v1113
        %v1146 = vunpack.c.l.b16 %v1114
        %v1147 = vunpack.c.l.b16 %v1115
        %v1148 = vunpack.c.l.b16 %v1116
        %v1149 = vpack.c.b16 %v1134, %v1133
        %v1150 = vpack.c.b16 %v1136, %v1135
        %v1151 = vpack.c.b16 %v1138, %v1137
        %v1152 = vpack.c.b16 %v1140, %v1139
        %v1153 = vpack.c.b16 %v1142, %v1141
        %v1154 = vpack.c.b16 %v1144, %v1143
        %v1155 = vpack.c.b16 %v1146, %v1145
        %v1156 = vpack.c.b16 %v1148, %v1147
        %1165 = vmatpush.bf16.msra.mxu0 %v1156
        %1166 = vmatpush.bf16.msra.mxu0 %v1155
        %1167 = vmatpush.bf16.msra.mxu0 %v1154
        %1168 = vmatpush.bf16.msra.mxu0 %v1153
        %1169 = vmatpush.bf16.msra.mxu0 %v1152
        %1170 = vmatpush.bf16.msra.mxu0 %v1151
        %1171 = vmatpush.bf16.msra.mxu0 %v1150
        %1172 = vmatpush.bf16.msra.mxu0 %v1149
        %1173 = vmatmul.bf16.gmra.mxu0 %v1100
        %v1174 = vpop.f32.mrf.mxu0
        %v1175 = vadd.f32 0.0, %v1174
        %v1176 = vpop.f32.mrf.mxu0
        %v1177 = vadd.f32 0.0, %v1176
        %1178 = vdwg.mxu0
        %v1179 = vpack.c.bf16 %v1177, %v1175
        %v1180 = vld [vmem:[#allocation13] sm:$0xf]
        %v1181 = vld [vmem:[#allocation13 + $0x4] sm:$0xf]
        %v1182 = vld [vmem:[#allocation13 + $0x8] sm:$0xf]
        %v1183 = vld [vmem:[#allocation13 + $0xc] sm:$0xf]
        %v1184 = vld [vmem:[#allocation13 + $0x10] sm:$0xf]
        %v1185 = vld [vmem:[#allocation13 + $0x14] sm:$0xf]
        %v1186 = vld [vmem:[#allocation13 + $0x18] sm:$0xf]
        %v1187 = vld [vmem:[#allocation13 + $0x1c] sm:$0xf]
        %v1188 = vld [vmem:[#allocation13 + $0x20] sm:$0xf]
        %v1189 = vld [vmem:[#allocation13 + $0x24] sm:$0xf]
        %v1190 = vld [vmem:[#allocation13 + $0x28] sm:$0xf]
        %v1191 = vld [vmem:[#allocation13 + $0x2c] sm:$0xf]
        %v1192 = vld [vmem:[#allocation13 + $0x30] sm:$0xf]
        %v1193 = vld [vmem:[#allocation13 + $0x34] sm:$0xf]
        %v1194 = vld [vmem:[#allocation13 + $0x38] sm:$0xf]
        %v1195 = vld [vmem:[#allocation13 + $0x3c] sm:$0xf]
        %v1196 = vld [vmem:[%s9] sm:$0x1]
        %v1198 = vperm.slane %v1196, 0
        %v1216 = vunpack.c.l.b16 %v1180
        %v1217 = vunpack.c.l.b16 %v1181
        %v1218 = vunpack.c.l.b16 %v1182
        %v1219 = vunpack.c.l.b16 %v1183
        %v1220 = vunpack.c.l.b16 %v1184
        %v1221 = vunpack.c.l.b16 %v1185
        %v1222 = vunpack.c.l.b16 %v1186
        %v1223 = vunpack.c.l.b16 %v1187
        %v1224 = vunpack.c.l.b16 %v1188
        %v1225 = vunpack.c.l.b16 %v1189
        %v1226 = vunpack.c.l.b16 %v1190
        %v1227 = vunpack.c.l.b16 %v1191
        %v1228 = vunpack.c.l.b16 %v1192
        %v1229 = vunpack.c.l.b16 %v1193
        %v1230 = vunpack.c.l.b16 %v1194
        %v1231 = vunpack.c.l.b16 %v1195
        %v1232 = vpack.c.b16 %v1217, %v1216
        %v1233 = vpack.c.b16 %v1219, %v1218
        %v1234 = vpack.c.b16 %v1221, %v1220
        %v1235 = vpack.c.b16 %v1223, %v1222
        %v1236 = vpack.c.b16 %v1225, %v1224
        %v1237 = vpack.c.b16 %v1227, %v1226
        %v1238 = vpack.c.b16 %v1229, %v1228
        %v1239 = vpack.c.b16 %v1231, %v1230
        %1248 = vmatpush.bf16.msra.mxu0 %v1239
        %1249 = vmatpush.bf16.msra.mxu0 %v1238
        %1250 = vmatpush.bf16.msra.mxu0 %v1237
        %1251 = vmatpush.bf16.msra.mxu0 %v1236
        %1252 = vmatpush.bf16.msra.mxu0 %v1235
        %1253 = vmatpush.bf16.msra.mxu0 %v1234
        %1254 = vmatpush.bf16.msra.mxu0 %v1233
        %1255 = vmatpush.bf16.msra.mxu0 %v1232
        %1256 = vmatmul.bf16.gmra.mxu0 %v1179
        %v1257 = vpop.f32.mrf.mxu0
        %v1258 = vadd.f32 %v1198, %v1257
        %v1259 = vpop.f32.mrf.mxu0
        %v1260 = vadd.f32 %v1198, %v1259
        %1261 = vdwg.mxu0
        %1262 = vst [vmem:[%s505] sm:$0xff] %v1258
        %1263 = vst [vmem:[%s505 + $0x8] sm:$0xff] %v1260
        %s1264 = sand.u32 %s276, 1
        %s1265 = scalar_lea.sflag [#allocation6], %s1264
        %s1266 = sand.u32 %s276, 1
        %s1267 = smul.addr %s1266, 16
        %s1268 = scalar_lea.vmem [#allocation15], %s1267
        // Predicated region
        $region89: #{tpu_custom_call.1} parent=59 // pred_check
          %p1269 = pneg %p286
        $region90: #{tpu_custom_call.1} parent=59 // pred_check_branch
          %1271 = sbr.rel (%p1269) target = $region92
        $region91: #{tpu_custom_call.1} parent=59 // pred_region
          %s1272 = smul.u32 2, %s37
          %1274 = vsyncadd %s1265, 0
          %s1275 = smul.addr %s36, 2
          %s1276 = sadd.s32 %s1272, %s1275
          %s1277 = smul.addr %s1276, 8
          %s1278 = scalar_lea.hbm %s10, %s1277
          %s1279 = sshll.u32 %s1268, 4
          %s1280 = int_to_ptr.vmem [resolvable:$true] %s1279
          %s1281 = sshll.u32 %s1278, 4
          %s1282 = int_to_ptr.hbm [resolvable:$true] %s1281
          %1287 = dma.vmem_to_hbm [thread:$0]  %s1280, 256, %s1282, %s1265, 128, 128, 8
        $region92: #{tpu_custom_call.1} parent=59 // pred_fallthru
          _
      $region60: #{tpu_custom_call.1} parent=5 // pred_fallthru
        _
      %p1288 = scmp.le.s32.totalorder 2, %s27
      // Predicated region
      $region93: #{tpu_custom_call.1} parent=5 // pred_check
        %p1289 = pneg %p1288
      $region94: #{tpu_custom_call.1} parent=5 // pred_check_branch
        %1291 = sbr.rel (%p1289) target = $region96
      $region95: #{tpu_custom_call.1} parent=5 // pred_region
        %s1292 = ssub.s32 %s27, 2
        // Predicated region
        $region97: #{tpu_custom_call.1} parent=95 // pred_check
          %p1293 = pneg %p292
        $region98: #{tpu_custom_call.1} parent=95 // pred_check_branch
          %1295 = sbr.rel (%p1293) target = $region100
        $region99: #{tpu_custom_call.1} parent=95 // pred_region
          %s1296 = sand.u32 %s277, 1
          %s1297 = scalar_lea.sflag [#allocation6], %s1296
          %s1298 = sand.u32 %s277, 1
          %s1299 = smul.addr %s1298, 16
          %s1300 = scalar_lea.vmem [#allocation15], %s1299
          %1302 = dma.done %s1297, 256
        $region100: #{tpu_custom_call.1} parent=95 // pred_fallthru
          _
      $region96: #{tpu_custom_call.1} parent=5 // pred_fallthru
        _
    $region6: #{tpu_custom_call.1} parent=1 // loop_footer
      %s31 = sadd.s32 1, %s27
    $region7: #{tpu_custom_call.1} parent=1 // loop_footer_branch
      %26 = sbr.rel target = $region3
    $region8: #{tpu_custom_call.1} parent=1 // loop_exit
      _
    %1303 = vsyncpa [#allocation5], 1
    %s1304 = scalar_lea.sflag [#allocation5], 1
    %1305 = vsyncpa %s1304, 1
    %1306 = vsyncpa [#allocation8], 1
    %s1307 = scalar_lea.sflag [#allocation8], 1
    %1308 = vsyncpa %s1307, 1
    %1309 = vsyncpa [#allocation11], 1
    %1310 = vsyncpa [#allocation14], 1
    %1311 = vsyncpa [#allocation6], 1
    %s1312 = scalar_lea.sflag [#allocation6], 1
    %1313 = vsyncpa %s1312, 1

</llo_original>
